<compile_context>
chip_gen: v6e
topology: v6e:2x2x1
jax: 0.10.0
libtpu: 0.0.40
codegen_flags: <defaults>
</compile_context>

<pallas_src>
import functools

import jax
import jax.numpy as jnp
from jax import lax
from jax.experimental import pallas as pl
from jax.experimental.pallas import tpu as pltpu

_MASK_VALUE = -1e30                 # finite large-negative fill; exp underflows to exactly 0
_VMEM_LIMIT = 32 * 1024 * 1024      # explicit scoped-VMEM budget (safe on v5e/v6e/v7x)


def _pick_tile(n, candidates):
    for c in candidates:
        if n % c == 0:
            return c
    return n


# ---------------------------------------------------------------------------
# Kernel 1: fused QKV projection.  y = x_tile @ [Wq*scale | Wk | Wv], split q/k/v.
# ---------------------------------------------------------------------------
def _qkv_proj_kernel(x_ref, w_ref, q_ref, k_ref, v_ref, *, H):
    y = jnp.dot(x_ref[...], w_ref[...], preferred_element_type=jnp.float32)  # (tm, 3H) f32
    q_ref[...] = y[:, :H].astype(q_ref.dtype)
    k_ref[...] = y[:, H:2 * H].astype(k_ref.dtype)
    v_ref[...] = y[:, 2 * H:].astype(v_ref.dtype)


# ---------------------------------------------------------------------------
# Kernel 2: flash-style causal attention with online softmax.
# grid = (B, num_q_tiles, num_kv_tiles); the kv axis (innermost) is the reduction.
# ---------------------------------------------------------------------------
def _flash_attn_kernel(q_ref, k_ref, v_ref, o_ref, m_sc, l_sc, acc_sc, *, tq, tk):
    qi = pl.program_id(1)
    ki = pl.program_id(2)

    @pl.when(ki == 0)
    def _init():
        m_sc[...] = jnp.full(m_sc.shape, -jnp.inf, jnp.float32)
        l_sc[...] = jnp.zeros(l_sc.shape, jnp.float32)
        acc_sc[...] = jnp.zeros(acc_sc.shape, jnp.float32)

    # Skip kv tiles strictly above the causal diagonal (tq == tk => fully masked).
    @pl.when(ki <= qi)
    def _compute():
        q = q_ref[0]            # (tq, H); 1/sqrt(H) already folded into Wq
        k = k_ref[0]            # (tk, H)
        v = v_ref[0]            # (tk, H)

        # q @ k^T, contracting the head dim directly (no explicit transpose).
        s = lax.dot_general(q, k, dimension_numbers=(((1,), (1,)), ((), ())),
                            preferred_element_type=jnp.float32)            # (tq, tk) f32

        # Block-local causal mask built from tile offsets.
        row = qi * tq + lax.broadcasted_iota(jnp.int32, (tq, tk), 0)
        col = ki * tk + lax.broadcasted_iota(jnp.int32, (tq, tk), 1)
        s = jnp.where(col <= row, s, _MASK_VALUE)

        m_prev = m_sc[...]
        m_new = jnp.maximum(m_prev, jnp.max(s, axis=-1, keepdims=True))
        alpha = jnp.exp(m_prev - m_new)                                     # 0 on first tile
        p = jnp.exp(s - m_new)
        l_sc[...] = alpha * l_sc[...] + jnp.sum(p, axis=-1, keepdims=True)
        acc_sc[...] = alpha * acc_sc[...] + jnp.dot(
            p.astype(v.dtype), v, preferred_element_type=jnp.float32)
        m_sc[...] = m_new

    @pl.when(ki == pl.num_programs(2) - 1)
    def _finalize():
        l = l_sc[...]
        inv = pl.reciprocal(l, approx=True)     # EUP slot (otherwise idle)
        inv = inv * (2.0 - l * inv)             # one Newton step -> near-exact 1/l
        o_ref[0] = (acc_sc[...] * inv).astype(o_ref.dtype)


def head_forward(x, w_key, w_query, w_value, *, compute_dtype=jnp.bfloat16):
    """x: (B, T, C); w_*: (C, head_size). Returns (B, T, head_size) in x.dtype (eval mode)."""
    B, T, C = x.shape
    H = w_key.shape[1]
    out_dtype = x.dtype
    scale = float(H) ** -0.5

    # Fold the 1/sqrt(H) score scale into the query weight; fuse Q/K/V weights -> (C, 3H).
    w_qkv = jnp.concatenate([w_query * scale, w_key, w_value], axis=1).astype(compute_dtype)

    # ---- fused QKV projection over the flattened (B*T, C) activation matrix ----
    M = B * T
    x2d = x.astype(compute_dtype).reshape(M, C)
    tm = _pick_tile(M, (512, 256, 128))
    qkv_shape = jax.ShapeDtypeStruct((M, H), compute_dtype)
    q2d, k2d, v2d = pl.pallas_call(
        functools.partial(_qkv_proj_kernel, H=H),
        out_shape=(qkv_shape, qkv_shape, qkv_shape),
        grid_spec=pltpu.PrefetchScalarGridSpec(
            num_scalar_prefetch=0,
            grid=(M // tm,),
            in_specs=[
                pl.BlockSpec((tm, C), lambda i: (i, 0)),
                pl.BlockSpec((C, 3 * H), lambda i: (0, 0)),   # weights resident in VMEM
            ],
            out_specs=[pl.BlockSpec((tm, H), lambda i: (i, 0)) for _ in range(3)],
        ),
        compiler_params=pltpu.CompilerParams(
            dimension_semantics=("parallel",),
            vmem_limit_bytes=_VMEM_LIMIT,
        ),
    )(x2d, w_qkv)
    q = q2d.reshape(B, T, H)
    k = k2d.reshape(B, T, H)
    v = v2d.reshape(B, T, H)

    # ---- flash attention over (B, q_tiles, kv_tiles) ----
    tq = _pick_tile(T, (128, 256))
    tk = tq                      # causal tile-skip logic assumes tq == tk
    nq, nkv = T // tq, T // tk

    kv_map = lambda b, qi, ki: (b, jnp.minimum(ki, qi), 0)   # clamp: no DMA for skipped tiles
    out = pl.pallas_call(
        functools.partial(_flash_attn_kernel, tq=tq, tk=tk),
        out_shape=jax.ShapeDtypeStruct((B, T, H), out_dtype),
        grid_spec=pltpu.PrefetchScalarGridSpec(
            num_scalar_prefetch=0,
            grid=(B, nq, nkv),
            in_specs=[
                pl.BlockSpec((1, tq, H), lambda b, qi, ki: (b, qi, 0)),
                pl.BlockSpec((1, tk, H), kv_map),
                pl.BlockSpec((1, tk, H), kv_map),
            ],
            out_specs=pl.BlockSpec((1, tq, H), lambda b, qi, ki: (b, qi, 0)),
            scratch_shapes=[
                pltpu.VMEM((tq, 1), jnp.float32),    # running max  m
                pltpu.VMEM((tq, 1), jnp.float32),    # running sum  l
                pltpu.VMEM((tq, H), jnp.float32),    # output accumulator
            ],
        ),
        compiler_params=pltpu.CompilerParams(
            dimension_semantics=("parallel", "parallel", "arbitrary"),
            vmem_limit_bytes=_VMEM_LIMIT,
        ),
    )(q, k, v)
    return out


def reference_forward(x, w_key, w_query, w_value):
    """Pure-JAX fp32 reference mirroring the PyTorch forward (eval mode)."""
    B, T, C = x.shape
    k = x @ w_key
    q = x @ w_query
    v = x @ w_value
    scale = k.shape[-1] ** -0.5
    wei = jnp.einsum("btd,bsd->bts", q, k) * scale
    mask = jnp.tril(jnp.ones((T, T), dtype=bool))
    wei = jnp.where(mask, wei, -jnp.inf)
    wei = jax.nn.softmax(wei, axis=-1)
    return jnp.einsum("bts,bsd->btd", wei, v)


if __name__ == "__main__":
    # Shapes consistent with the module: n_embd=384, block_size=256, head_size = n_embd // 6.
    B, T, C, head_size = 2, 256, 384, 64

    key = jax.random.PRNGKey(0)
    kx, kk, kq, kv = jax.random.split(key, 4)
    x = jax.random.normal(kx, (B, T, C), dtype=jnp.float32)

    # nn.Linear(n_embd, head_size, bias=False) default init: U(-1/sqrt(C), 1/sqrt(C))
    bound = 1.0 / (C ** 0.5)
    w_key = jax.random.uniform(kk, (C, head_size), jnp.float32, -bound, bound)
    w_query = jax.random.uniform(kq, (C, head_size), jnp.float32, -bound, bound)
    w_value = jax.random.uniform(kv, (C, head_size), jnp.float32, -bound, bound)

    ref = reference_forward(x, w_key, w_query, w_value)

    # fp32 MXU path: tight check of flash tiling / causal masking / online softmax.
    out_f32 = jax.block_until_ready(
        head_forward(x, w_key, w_query, w_value, compute_dtype=jnp.float32))
    assert out_f32.shape == (B, T, head_size)
    assert jnp.allclose(out_f32, ref, atol=1e-3, rtol=1e-3), "fp32 path mismatch vs reference"

    # bf16 MXU path (default; fp32 accumulation): looser tolerance.
    out_bf16 = jax.block_until_ready(head_forward(x, w_key, w_query, w_value))
    assert out_bf16.shape == (B, T, head_size) and out_bf16.dtype == x.dtype
    assert jnp.allclose(out_bf16, ref, atol=5e-2, rtol=5e-2), "bf16 path mismatch vs reference"

    print("KERNEL_OK")
</pallas_src>

<mosaic_0001>
module attributes {stable_mosaic.version = 11 : i64} {
  func.func @_qkv_proj_kernel(%arg0: i32, %arg1: memref<512x384xf32, #tpu.memory_space<vmem>>, %arg2: memref<384x192xf32, #tpu.memory_space<vmem>>, %arg3: memref<512x64xf32, #tpu.memory_space<vmem>>, %arg4: memref<512x64xf32, #tpu.memory_space<vmem>>, %arg5: memref<512x64xf32, #tpu.memory_space<vmem>>) attributes {dimension_semantics = [#tpu.dimension_semantics<parallel>], iteration_bounds = array<i64: 1>, scalar_prefetch = 0 : i64, scratch_operands = 0 : i64, tpu.core_type = #tpu.core_type<tc>, window_params = [{transform_indices = @transform_0, window_bounds = array<i64: 512, 384>}, {pipeline_mode = #tpu.pipeline_mode<synchronous>, transform_indices = @transform_1, window_bounds = array<i64: 384, 192>}, {transform_indices = @transform_2, window_bounds = array<i64: 512, 64>}, {transform_indices = @transform_3, window_bounds = array<i64: 512, 64>}, {transform_indices = @transform_4, window_bounds = array<i64: 512, 64>}]} {
    %c0 = arith.constant 0 : index
    %c0_0 = arith.constant 0 : index
    %0 = vector.load %arg1[%c0, %c0_0] : memref<512x384xf32, #tpu.memory_space<vmem>>, vector<512x384xf32>
    %c0_1 = arith.constant 0 : index
    %c0_2 = arith.constant 0 : index
    %1 = vector.load %arg2[%c0_1, %c0_2] : memref<384x192xf32, #tpu.memory_space<vmem>>, vector<384x192xf32>
    %cst = arith.constant dense<0.000000e+00> : vector<512x192xf32>
    %2 = tpu.matmul %0, %1, %cst {dimension_numbers = #tpu.dot_dimension_numbers<[1], [0], [0], [1], [0, 0, 1, 1], [], []>} : vector<512x384xf32>, vector<384x192xf32>, vector<512x192xf32> -> vector<512x192xf32>
    %3 = vector.extract_strided_slice %2 {offsets = [0, 0], sizes = [512, 64], strides = [1, 1]} : vector<512x192xf32> to vector<512x64xf32>
    %c0_3 = arith.constant 0 : index
    %c0_4 = arith.constant 0 : index
    %4 = vector.load %arg3[%c0_3, %c0_4] : memref<512x64xf32, #tpu.memory_space<vmem>>, vector<512x64xf32>
    tpu.vector_store %arg3[%c0_3, %c0_4], %3 {strides = array<i32>} : memref<512x64xf32, #tpu.memory_space<vmem>>, vector<512x64xf32>,
    %5 = vector.extract_strided_slice %2 {offsets = [0, 64], sizes = [512, 64], strides = [1, 1]} : vector<512x192xf32> to vector<512x64xf32>
    %c0_5 = arith.constant 0 : index
    %c0_6 = arith.constant 0 : index
    %6 = vector.load %arg4[%c0_5, %c0_6] : memref<512x64xf32, #tpu.memory_space<vmem>>, vector<512x64xf32>
    tpu.vector_store %arg4[%c0_5, %c0_6], %5 {strides = array<i32>} : memref<512x64xf32, #tpu.memory_space<vmem>>, vector<512x64xf32>,
    %7 = vector.extract_strided_slice %2 {offsets = [0, 128], sizes = [512, 64], strides = [1, 1]} : vector<512x192xf32> to vector<512x64xf32>
    %c0_7 = arith.constant 0 : index
    %c0_8 = arith.constant 0 : index
    %8 = vector.load %arg5[%c0_7, %c0_8] : memref<512x64xf32, #tpu.memory_space<vmem>>, vector<512x64xf32>
    tpu.vector_store %arg5[%c0_7, %c0_8], %7 {strides = array<i32>} : memref<512x64xf32, #tpu.memory_space<vmem>>, vector<512x64xf32>,
    return
  }
  func.func @transform_0(%arg0: i32) -> (i32, i32) {
    %c0_i32 = arith.constant 0 : i32
    %c0_i32_0 = arith.constant 0 : i32
    return %arg0, %c0_i32 : i32, i32
  }
  func.func @transform_1(%arg0: i32) -> (i32, i32) {
    %c0_i32 = arith.constant 0 : i32
    %c0_i32_0 = arith.constant 0 : i32
    %c0_i32_1 = arith.constant 0 : i32
    return %c0_i32, %c0_i32_0 : i32, i32
  }
  func.func @transform_2(%arg0: i32) -> (i32, i32) {
    %c0_i32 = arith.constant 0 : i32
    %c0_i32_0 = arith.constant 0 : i32
    return %arg0, %c0_i32 : i32, i32
  }
  func.func @transform_3(%arg0: i32) -> (i32, i32) {
    %c0_i32 = arith.constant 0 : i32
    %c0_i32_0 = arith.constant 0 : i32
    return %arg0, %c0_i32 : i32, i32
  }
  func.func @transform_4(%arg0: i32) -> (i32, i32) {
    %c0_i32 = arith.constant 0 : i32
    %c0_i32_0 = arith.constant 0 : i32
    return %arg0, %c0_i32 : i32, i32
  }
}

</mosaic_0001>

<llo_original>
// kernel: tpu_custom_call.1
$region0: #{tpu_custom_call.1}
  #allocation0 [shape = 'u32[]', space=smem, size = 0x4, offset = 0x4, fixed_abs, tag = 'smem constant byte address 0x4 - core index']
  #allocation1 [shape = 'u32[144,128]{1,0:T(1,128)}', space=vmem, size = 0x12000, scoped, tag = 'internal scratch']
  %s0 = inlined_call_operand.hbm [shape: f32[512,384], index: 0, kind: input, shape index: {}]
  %s1 = inlined_call_operand.vmem [shape: f32[384,192], index: 1, kind: input, shape index: {}]
  %s2 = inlined_call_operand.vmem [shape: f32[512,64], index: 2, kind: output, shape index: {0}]
  %s3 = inlined_call_operand.vmem [shape: f32[512,64], index: 3, kind: output, shape index: {1}]
  %s4 = inlined_call_operand.vmem [shape: f32[512,64], index: 4, kind: output, shape index: {2}]
  %5 = xla_tuple %s2, %s3, %s4
  %s6 = sld [smem:[#allocation0]]
  $region38: #{tpu_custom_call.1} parent=0
    _
  %s8 = ssub.s32 1, %s6
  %s9 = scalar_select 0, %s8, %s6
  $region1: #{tpu_custom_call.1} parent=0
    #allocation2 [shape = 'u8[786432]{0}', space=vmem, size = 0xc0000, scoped, tag = 'input window, operand 0, single buffered']
    #allocation3 [shape = 's32[1]{0}', space=sflag, size = 0x4, scoped, tag = 'scoped memory for tpu_custom_call.1']
    %10 = vsyncpa [#allocation3], 0
    // Predicated region
    $region2: #{tpu_custom_call.1} parent=1 // pred_check
      _
    $region3: #{tpu_custom_call.1} parent=1 // pred_check_branch
      %12 = sbr.rel (0) target = $region5
    $region4: #{tpu_custom_call.1} parent=1 // pred_region
      %s14 = ssub.s32 24576, 24576
      %15 = vsyncadd [#allocation3], %s14
      %s16 = sshll.u32 [#allocation2], 4
      %s17 = int_to_ptr.vmem [resolvable:$true] %s16
      %22 = dma.hbm_to_vmem [thread:$0]  %s0, 24576, %s17, [#allocation3], 384, 384, 24
    $region5: #{tpu_custom_call.1} parent=1 // pred_fallthru
      _
    // Predicated region
    $region6: #{tpu_custom_call.1} parent=1 // pred_check
      _
    $region7: #{tpu_custom_call.1} parent=1 // pred_check_branch
      %24 = sbr.rel (0) target = $region9
    $region8: #{tpu_custom_call.1} parent=1 // pred_region
      _
    $region9: #{tpu_custom_call.1} parent=1 // pred_fallthru
      _
    // Predicated region
    $region10: #{tpu_custom_call.1} parent=1 // pred_check
      _
    $region11: #{tpu_custom_call.1} parent=1 // pred_check_branch
      %26 = sbr.rel (0) target = $region13
    $region12: #{tpu_custom_call.1} parent=1 // pred_region
      %27 = dma.done [#allocation3], 24576
    $region13: #{tpu_custom_call.1} parent=1 // pred_fallthru
      _
    %v28 = vld [vmem:[#allocation2] sm:$0xff]
    %v29 = vld [vmem:[#allocation2 + $0x8] sm:$0xff]
    %v30 = vld [vmem:[#allocation2 + $0x10] sm:$0xff]
    %v31 = vld [vmem:[#allocation2 + $0x18] sm:$0xff]
    %v32 = vld [vmem:[#allocation2 + $0x20] sm:$0xff]
    %v33 = vld [vmem:[#allocation2 + $0x28] sm:$0xff]
    %v34 = vld [vmem:[#allocation2 + $0x30] sm:$0xff]
    %v35 = vld [vmem:[#allocation2 + $0x38] sm:$0xff]
    %v36 = vld [vmem:[#allocation2 + $0x40] sm:$0xff]
    %v37 = vld [vmem:[#allocation2 + $0x48] sm:$0xff]
    %v38 = vld [vmem:[#allocation2 + $0x50] sm:$0xff]
    %v39 = vld [vmem:[#allocation2 + $0x58] sm:$0xff]
    %v40 = vld [vmem:[#allocation2 + $0x60] sm:$0xff]
    %v41 = vld [vmem:[#allocation2 + $0x68] sm:$0xff]
    %v42 = vld [vmem:[#allocation2 + $0x70] sm:$0xff]
    %v43 = vld [vmem:[#allocation2 + $0x78] sm:$0xff]
    %v44 = vld [vmem:[#allocation2 + $0x80] sm:$0xff]
    %v45 = vld [vmem:[#allocation2 + $0x88] sm:$0xff]
    %v46 = vld [vmem:[#allocation2 + $0x90] sm:$0xff]
    %v47 = vld [vmem:[#allocation2 + $0x98] sm:$0xff]
    %v48 = vld [vmem:[#allocation2 + $0xa0] sm:$0xff]
    %v49 = vld [vmem:[#allocation2 + $0xa8] sm:$0xff]
    %v50 = vld [vmem:[#allocation2 + $0xb0] sm:$0xff]
    %v51 = vld [vmem:[#allocation2 + $0xb8] sm:$0xff]
    %v52 = vld [vmem:[#allocation2 + $0xc0] sm:$0xff]
    %v53 = vld [vmem:[#allocation2 + $0xc8] sm:$0xff]
    %v54 = vld [vmem:[#allocation2 + $0xd0] sm:$0xff]
    %v55 = vld [vmem:[#allocation2 + $0xd8] sm:$0xff]
    %v56 = vld [vmem:[#allocation2 + $0xe0] sm:$0xff]
    %v57 = vld [vmem:[#allocation2 + $0xe8] sm:$0xff]
    %v58 = vld [vmem:[#allocation2 + $0xf0] sm:$0xff]
    %v59 = vld [vmem:[#allocation2 + $0xf8] sm:$0xff]
    %v60 = vld [vmem:[#allocation2 + $0x100] sm:$0xff]
    %v61 = vld [vmem:[#allocation2 + $0x108] sm:$0xff]
    %v62 = vld [vmem:[#allocation2 + $0x110] sm:$0xff]
    %v63 = vld [vmem:[#allocation2 + $0x118] sm:$0xff]
    %v64 = vld [vmem:[#allocation2 + $0x120] sm:$0xff]
    %v65 = vld [vmem:[#allocation2 + $0x128] sm:$0xff]
    %v66 = vld [vmem:[#allocation2 + $0x130] sm:$0xff]
    %v67 = vld [vmem:[#allocation2 + $0x138] sm:$0xff]
    %v68 = vld [vmem:[#allocation2 + $0x140] sm:$0xff]
    %v69 = vld [vmem:[#allocation2 + $0x148] sm:$0xff]
    %v70 = vld [vmem:[#allocation2 + $0x150] sm:$0xff]
    %v71 = vld [vmem:[#allocation2 + $0x158] sm:$0xff]
    %v72 = vld [vmem:[#allocation2 + $0x160] sm:$0xff]
    %v73 = vld [vmem:[#allocation2 + $0x168] sm:$0xff]
    %v74 = vld [vmem:[#allocation2 + $0x170] sm:$0xff]
    %v75 = vld [vmem:[#allocation2 + $0x178] sm:$0xff]
    %v76 = vld [vmem:[#allocation2 + $0x180] sm:$0xff]
    %v77 = vld [vmem:[#allocation2 + $0x188] sm:$0xff]
    %v78 = vld [vmem:[#allocation2 + $0x190] sm:$0xff]
    %v79 = vld [vmem:[#allocation2 + $0x198] sm:$0xff]
    %v80 = vld [vmem:[#allocation2 + $0x1a0] sm:$0xff]
    %v81 = vld [vmem:[#allocation2 + $0x1a8] sm:$0xff]
    %v82 = vld [vmem:[#allocation2 + $0x1b0] sm:$0xff]
    %v83 = vld [vmem:[#allocation2 + $0x1b8] sm:$0xff]
    %v84 = vld [vmem:[#allocation2 + $0x1c0] sm:$0xff]
    %v85 = vld [vmem:[#allocation2 + $0x1c8] sm:$0xff]
    %v86 = vld [vmem:[#allocation2 + $0x1d0] sm:$0xff]
    %v87 = vld [vmem:[#allocation2 + $0x1d8] sm:$0xff]
    %v88 = vld [vmem:[#allocation2 + $0x1e0] sm:$0xff]
    %v89 = vld [vmem:[#allocation2 + $0x1e8] sm:$0xff]
    %v90 = vld [vmem:[#allocation2 + $0x1f0] sm:$0xff]
    %v91 = vld [vmem:[#allocation2 + $0x1f8] sm:$0xff]
    %v92 = vld [vmem:[#allocation2 + $0x200] sm:$0xff]
    %v93 = vld [vmem:[#allocation2 + $0x208] sm:$0xff]
    %v94 = vld [vmem:[#allocation2 + $0x210] sm:$0xff]
    %v95 = vld [vmem:[#allocation2 + $0x218] sm:$0xff]
    %v96 = vld [vmem:[#allocation2 + $0x220] sm:$0xff]
    %v97 = vld [vmem:[#allocation2 + $0x228] sm:$0xff]
    %v98 = vld [vmem:[#allocation2 + $0x230] sm:$0xff]
    %v99 = vld [vmem:[#allocation2 + $0x238] sm:$0xff]
    %v100 = vld [vmem:[#allocation2 + $0x240] sm:$0xff]
    %v101 = vld [vmem:[#allocation2 + $0x248] sm:$0xff]
    %v102 = vld [vmem:[#allocation2 + $0x250] sm:$0xff]
    %v103 = vld [vmem:[#allocation2 + $0x258] sm:$0xff]
    %v104 = vld [vmem:[#allocation2 + $0x260] sm:$0xff]
    %v105 = vld [vmem:[#allocation2 + $0x268] sm:$0xff]
    %v106 = vld [vmem:[#allocation2 + $0x270] sm:$0xff]
    %v107 = vld [vmem:[#allocation2 + $0x278] sm:$0xff]
    %v108 = vld [vmem:[#allocation2 + $0x280] sm:$0xff]
    %v109 = vld [vmem:[#allocation2 + $0x288] sm:$0xff]
    %v110 = vld [vmem:[#allocation2 + $0x290] sm:$0xff]
    %v111 = vld [vmem:[#allocation2 + $0x298] sm:$0xff]
    %v112 = vld [vmem:[#allocation2 + $0x2a0] sm:$0xff]
    %v113 = vld [vmem:[#allocation2 + $0x2a8] sm:$0xff]
    %v114 = vld [vmem:[#allocation2 + $0x2b0] sm:$0xff]
    %v115 = vld [vmem:[#allocation2 + $0x2b8] sm:$0xff]
    %v116 = vld [vmem:[#allocation2 + $0x2c0] sm:$0xff]
    %v117 = vld [vmem:[#allocation2 + $0x2c8] sm:$0xff]
    %v118 = vld [vmem:[#allocation2 + $0x2d0] sm:$0xff]
    %v119 = vld [vmem:[#allocation2 + $0x2d8] sm:$0xff]
    %v120 = vld [vmem:[#allocation2 + $0x2e0] sm:$0xff]
    %v121 = vld [vmem:[#allocation2 + $0x2e8] sm:$0xff]
    %v122 = vld [vmem:[#allocation2 + $0x2f0] sm:$0xff]
    %v123 = vld [vmem:[#allocation2 + $0x2f8] sm:$0xff]
    %v124 = vld [vmem:[#allocation2 + $0x300] sm:$0xff]
    %v125 = vld [vmem:[#allocation2 + $0x308] sm:$0xff]
    %v126 = vld [vmem:[#allocation2 + $0x310] sm:$0xff]
    %v127 = vld [vmem:[#allocation2 + $0x318] sm:$0xff]
    %v128 = vld [vmem:[#allocation2 + $0x320] sm:$0xff]
    %v129 = vld [vmem:[#allocation2 + $0x328] sm:$0xff]
    %v130 = vld [vmem:[#allocation2 + $0x330] sm:$0xff]
    %v131 = vld [vmem:[#allocation2 + $0x338] sm:$0xff]
    %v132 = vld [vmem:[#allocation2 + $0x340] sm:$0xff]
    %v133 = vld [vmem:[#allocation2 + $0x348] sm:$0xff]
    %v134 = vld [vmem:[#allocation2 + $0x350] sm:$0xff]
    %v135 = vld [vmem:[#allocation2 + $0x358] sm:$0xff]
    %v136 = vld [vmem:[#allocation2 + $0x360] sm:$0xff]
    %v137 = vld [vmem:[#allocation2 + $0x368] sm:$0xff]
    %v138 = vld [vmem:[#allocation2 + $0x370] sm:$0xff]
    %v139 = vld [vmem:[#allocation2 + $0x378] sm:$0xff]
    %v140 = vld [vmem:[#allocation2 + $0x380] sm:$0xff]
    %v141 = vld [vmem:[#allocation2 + $0x388] sm:$0xff]
    %v142 = vld [vmem:[#allocation2 + $0x390] sm:$0xff]
    %v143 = vld [vmem:[#allocation2 + $0x398] sm:$0xff]
    %v144 = vld [vmem:[#allocation2 + $0x3a0] sm:$0xff]
    %v145 = vld [vmem:[#allocation2 + $0x3a8] sm:$0xff]
    %v146 = vld [vmem:[#allocation2 + $0x3b0] sm:$0xff]
    %v147 = vld [vmem:[#allocation2 + $0x3b8] sm:$0xff]
    %v148 = vld [vmem:[#allocation2 + $0x3c0] sm:$0xff]
    %v149 = vld [vmem:[#allocation2 + $0x3c8] sm:$0xff]
    %v150 = vld [vmem:[#allocation2 + $0x3d0] sm:$0xff]
    %v151 = vld [vmem:[#allocation2 + $0x3d8] sm:$0xff]
    %v152 = vld [vmem:[#allocation2 + $0x3e0] sm:$0xff]
    %v153 = vld [vmem:[#allocation2 + $0x3e8] sm:$0xff]
    %v154 = vld [vmem:[#allocation2 + $0x3f0] sm:$0xff]
    %v155 = vld [vmem:[#allocation2 + $0x3f8] sm:$0xff]
    %v156 = vld [vmem:[#allocation2 + $0x400] sm:$0xff]
    %v157 = vld [vmem:[#allocation2 + $0x408] sm:$0xff]
    %v158 = vld [vmem:[#allocation2 + $0x410] sm:$0xff]
    %v159 = vld [vmem:[#allocation2 + $0x418] sm:$0xff]
    %v160 = vld [vmem:[#allocation2 + $0x420] sm:$0xff]
    %v161 = vld [vmem:[#allocation2 + $0x428] sm:$0xff]
    %v162 = vld [vmem:[#allocation2 + $0x430] sm:$0xff]
    %v163 = vld [vmem:[#allocation2 + $0x438] sm:$0xff]
    %v164 = vld [vmem:[#allocation2 + $0x440] sm:$0xff]
    %v165 = vld [vmem:[#allocation2 + $0x448] sm:$0xff]
    %v166 = vld [vmem:[#allocation2 + $0x450] sm:$0xff]
    %v167 = vld [vmem:[#allocation2 + $0x458] sm:$0xff]
    %v168 = vld [vmem:[#allocation2 + $0x460] sm:$0xff]
    %v169 = vld [vmem:[#allocation2 + $0x468] sm:$0xff]
    %v170 = vld [vmem:[#allocation2 + $0x470] sm:$0xff]
    %v171 = vld [vmem:[#allocation2 + $0x478] sm:$0xff]
    %v172 = vld [vmem:[#allocation2 + $0x480] sm:$0xff]
    %v173 = vld [vmem:[#allocation2 + $0x488] sm:$0xff]
    %v174 = vld [vmem:[#allocation2 + $0x490] sm:$0xff]
    %v175 = vld [vmem:[#allocation2 + $0x498] sm:$0xff]
    %v176 = vld [vmem:[#allocation2 + $0x4a0] sm:$0xff]
    %v177 = vld [vmem:[#allocation2 + $0x4a8] sm:$0xff]
    %v178 = vld [vmem:[#allocation2 + $0x4b0] sm:$0xff]
    %v179 = vld [vmem:[#allocation2 + $0x4b8] sm:$0xff]
    %v180 = vld [vmem:[#allocation2 + $0x4c0] sm:$0xff]
    %v181 = vld [vmem:[#allocation2 + $0x4c8] sm:$0xff]
    %v182 = vld [vmem:[#allocation2 + $0x4d0] sm:$0xff]
    %v183 = vld [vmem:[#allocation2 + $0x4d8] sm:$0xff]
    %v184 = vld [vmem:[#allocation2 + $0x4e0] sm:$0xff]
    %v185 = vld [vmem:[#allocation2 + $0x4e8] sm:$0xff]
    %v186 = vld [vmem:[#allocation2 + $0x4f0] sm:$0xff]
    %v187 = vld [vmem:[#allocation2 + $0x4f8] sm:$0xff]
    %v188 = vld [vmem:[#allocation2 + $0x500] sm:$0xff]
    %v189 = vld [vmem:[#allocation2 + $0x508] sm:$0xff]
    %v190 = vld [vmem:[#allocation2 + $0x510] sm:$0xff]
    %v191 = vld [vmem:[#allocation2 + $0x518] sm:$0xff]
    %v192 = vld [vmem:[#allocation2 + $0x520] sm:$0xff]
    %v193 = vld [vmem:[#allocation2 + $0x528] sm:$0xff]
    %v194 = vld [vmem:[#allocation2 + $0x530] sm:$0xff]
    %v195 = vld [vmem:[#allocation2 + $0x538] sm:$0xff]
    %v196 = vld [vmem:[#allocation2 + $0x540] sm:$0xff]
    %v197 = vld [vmem:[#allocation2 + $0x548] sm:$0xff]
    %v198 = vld [vmem:[#allocation2 + $0x550] sm:$0xff]
    %v199 = vld [vmem:[#allocation2 + $0x558] sm:$0xff]
    %v200 = vld [vmem:[#allocation2 + $0x560] sm:$0xff]
    %v201 = vld [vmem:[#allocation2 + $0x568] sm:$0xff]
    %v202 = vld [vmem:[#allocation2 + $0x570] sm:$0xff]
    %v203 = vld [vmem:[#allocation2 + $0x578] sm:$0xff]
    %v204 = vld [vmem:[#allocation2 + $0x580] sm:$0xff]
    %v205 = vld [vmem:[#allocation2 + $0x588] sm:$0xff]
    %v206 = vld [vmem:[#allocation2 + $0x590] sm:$0xff]
    %v207 = vld [vmem:[#allocation2 + $0x598] sm:$0xff]
    %v208 = vld [vmem:[#allocation2 + $0x5a0] sm:$0xff]
    %v209 = vld [vmem:[#allocation2 + $0x5a8] sm:$0xff]
    %v210 = vld [vmem:[#allocation2 + $0x5b0] sm:$0xff]
    %v211 = vld [vmem:[#allocation2 + $0x5b8] sm:$0xff]
    %v212 = vld [vmem:[#allocation2 + $0x5c0] sm:$0xff]
    %v213 = vld [vmem:[#allocation2 + $0x5c8] sm:$0xff]
    %v214 = vld [vmem:[#allocation2 + $0x5d0] sm:$0xff]
    %v215 = vld [vmem:[#allocation2 + $0x5d8] sm:$0xff]
    %v216 = vld [vmem:[#allocation2 + $0x5e0] sm:$0xff]
    %v217 = vld [vmem:[#allocation2 + $0x5e8] sm:$0xff]
    %v218 = vld [vmem:[#allocation2 + $0x5f0] sm:$0xff]
    %v219 = vld [vmem:[#allocation2 + $0x5f8] sm:$0xff]
    %v220 = vld [vmem:[%s1] sm:$0xff]
    %v221 = vld [vmem:[%s1 + $0x8] sm:$0xff]
    %v222 = vld [vmem:[%s1 + $0x10] sm:$0xff]
    %v223 = vld [vmem:[%s1 + $0x18] sm:$0xff]
    %v224 = vld [vmem:[%s1 + $0x20] sm:$0xff]
    %v225 = vld [vmem:[%s1 + $0x28] sm:$0xff]
    %v226 = vld [vmem:[%s1 + $0x30] sm:$0xff]
    %v227 = vld [vmem:[%s1 + $0x38] sm:$0xff]
    %v228 = vld [vmem:[%s1 + $0x40] sm:$0xff]
    %v229 = vld [vmem:[%s1 + $0x48] sm:$0xff]
    %v230 = vld [vmem:[%s1 + $0x50] sm:$0xff]
    %v231 = vld [vmem:[%s1 + $0x58] sm:$0xff]
    %v232 = vld [vmem:[%s1 + $0x60] sm:$0xff]
    %v233 = vld [vmem:[%s1 + $0x68] sm:$0xff]
    %v234 = vld [vmem:[%s1 + $0x70] sm:$0xff]
    %v235 = vld [vmem:[%s1 + $0x78] sm:$0xff]
    %v236 = vld [vmem:[%s1 + $0x80] sm:$0xff]
    %v237 = vld [vmem:[%s1 + $0x88] sm:$0xff]
    %v238 = vld [vmem:[%s1 + $0x90] sm:$0xff]
    %v239 = vld [vmem:[%s1 + $0x98] sm:$0xff]
    %v240 = vld [vmem:[%s1 + $0xa0] sm:$0xff]
    %v241 = vld [vmem:[%s1 + $0xa8] sm:$0xff]
    %v242 = vld [vmem:[%s1 + $0xb0] sm:$0xff]
    %v243 = vld [vmem:[%s1 + $0xb8] sm:$0xff]
    %v244 = vld [vmem:[%s1 + $0xc0] sm:$0xff]
    %v245 = vld [vmem:[%s1 + $0xc8] sm:$0xff]
    %v246 = vld [vmem:[%s1 + $0xd0] sm:$0xff]
    %v247 = vld [vmem:[%s1 + $0xd8] sm:$0xff]
    %v248 = vld [vmem:[%s1 + $0xe0] sm:$0xff]
    %v249 = vld [vmem:[%s1 + $0xe8] sm:$0xff]
    %v250 = vld [vmem:[%s1 + $0xf0] sm:$0xff]
    %v251 = vld [vmem:[%s1 + $0xf8] sm:$0xff]
    %v252 = vld [vmem:[%s1 + $0x100] sm:$0xff]
    %v253 = vld [vmem:[%s1 + $0x108] sm:$0xff]
    %v254 = vld [vmem:[%s1 + $0x110] sm:$0xff]
    %v255 = vld [vmem:[%s1 + $0x118] sm:$0xff]
    %v256 = vld [vmem:[%s1 + $0x120] sm:$0xff]
    %v257 = vld [vmem:[%s1 + $0x128] sm:$0xff]
    %v258 = vld [vmem:[%s1 + $0x130] sm:$0xff]
    %v259 = vld [vmem:[%s1 + $0x138] sm:$0xff]
    %v260 = vld [vmem:[%s1 + $0x140] sm:$0xff]
    %v261 = vld [vmem:[%s1 + $0x148] sm:$0xff]
    %v262 = vld [vmem:[%s1 + $0x150] sm:$0xff]
    %v263 = vld [vmem:[%s1 + $0x158] sm:$0xff]
    %v264 = vld [vmem:[%s1 + $0x160] sm:$0xff]
    %v265 = vld [vmem:[%s1 + $0x168] sm:$0xff]
    %v266 = vld [vmem:[%s1 + $0x170] sm:$0xff]
    %v267 = vld [vmem:[%s1 + $0x178] sm:$0xff]
    %v268 = vld [vmem:[%s1 + $0x180] sm:$0xff]
    %v269 = vld [vmem:[%s1 + $0x188] sm:$0xff]
    %v270 = vld [vmem:[%s1 + $0x190] sm:$0xff]
    %v271 = vld [vmem:[%s1 + $0x198] sm:$0xff]
    %v272 = vld [vmem:[%s1 + $0x1a0] sm:$0xff]
    %v273 = vld [vmem:[%s1 + $0x1a8] sm:$0xff]
    %v274 = vld [vmem:[%s1 + $0x1b0] sm:$0xff]
    %v275 = vld [vmem:[%s1 + $0x1b8] sm:$0xff]
    %v276 = vld [vmem:[%s1 + $0x1c0] sm:$0xff]
    %v277 = vld [vmem:[%s1 + $0x1c8] sm:$0xff]
    %v278 = vld [vmem:[%s1 + $0x1d0] sm:$0xff]
    %v279 = vld [vmem:[%s1 + $0x1d8] sm:$0xff]
    %v280 = vld [vmem:[%s1 + $0x1e0] sm:$0xff]
    %v281 = vld [vmem:[%s1 + $0x1e8] sm:$0xff]
    %v282 = vld [vmem:[%s1 + $0x1f0] sm:$0xff]
    %v283 = vld [vmem:[%s1 + $0x1f8] sm:$0xff]
    %v284 = vld [vmem:[%s1 + $0x200] sm:$0xff]
    %v285 = vld [vmem:[%s1 + $0x208] sm:$0xff]
    %v286 = vld [vmem:[%s1 + $0x210] sm:$0xff]
    %v287 = vld [vmem:[%s1 + $0x218] sm:$0xff]
    %v288 = vld [vmem:[%s1 + $0x220] sm:$0xff]
    %v289 = vld [vmem:[%s1 + $0x228] sm:$0xff]
    %v290 = vld [vmem:[%s1 + $0x230] sm:$0xff]
    %v291 = vld [vmem:[%s1 + $0x238] sm:$0xff]
    %v292 = vld [vmem:[%s1 + $0x240] sm:$0xff]
    %v293 = vld [vmem:[%s1 + $0x248] sm:$0xff]
    %v294 = vld [vmem:[%s1 + $0x250] sm:$0xff]
    %v295 = vld [vmem:[%s1 + $0x258] sm:$0xff]
    %v296 = vld [vmem:[%s1 + $0x260] sm:$0xff]
    %v297 = vld [vmem:[%s1 + $0x268] sm:$0xff]
    %v298 = vld [vmem:[%s1 + $0x270] sm:$0xff]
    %v299 = vld [vmem:[%s1 + $0x278] sm:$0xff]
    %v300 = vld [vmem:[%s1 + $0x280] sm:$0xff]
    %v301 = vld [vmem:[%s1 + $0x288] sm:$0xff]
    %v302 = vld [vmem:[%s1 + $0x290] sm:$0xff]
    %v303 = vld [vmem:[%s1 + $0x298] sm:$0xff]
    %v304 = vld [vmem:[%s1 + $0x2a0] sm:$0xff]
    %v305 = vld [vmem:[%s1 + $0x2a8] sm:$0xff]
    %v306 = vld [vmem:[%s1 + $0x2b0] sm:$0xff]
    %v307 = vld [vmem:[%s1 + $0x2b8] sm:$0xff]
    %v308 = vld [vmem:[%s1 + $0x2c0] sm:$0xff]
    %v309 = vld [vmem:[%s1 + $0x2c8] sm:$0xff]
    %v310 = vld [vmem:[%s1 + $0x2d0] sm:$0xff]
    %v311 = vld [vmem:[%s1 + $0x2d8] sm:$0xff]
    %v312 = vld [vmem:[%s1 + $0x2e0] sm:$0xff]
    %v313 = vld [vmem:[%s1 + $0x2e8] sm:$0xff]
    %v314 = vld [vmem:[%s1 + $0x2f0] sm:$0xff]
    %v315 = vld [vmem:[%s1 + $0x2f8] sm:$0xff]
    %316 = vmatprep.subr.mxu0 %v251
    %317 = vmatpush1.msra.mxu0 %v250
    %318 = vmatprep.subr.mxu0 %v249
    %319 = vmatpush1.msra.mxu0 %v248
    %320 = vmatprep.subr.mxu0 %v247
    %321 = vmatpush1.msra.mxu0 %v246
    %322 = vmatprep.subr.mxu0 %v245
    %323 = vmatpush1.msra.mxu0 %v244
    %324 = vmatprep.subr.mxu0 %v243
    %325 = vmatpush1.msra.mxu0 %v242
    %326 = vmatprep.subr.mxu0 %v241
    %327 = vmatpush1.msra.mxu0 %v240
    %328 = vmatprep.subr.mxu0 %v239
    %329 = vmatpush1.msra.mxu0 %v238
    %330 = vmatprep.subr.mxu0 %v237
    %331 = vmatpush1.msra.mxu0 %v236
    %332 = vmatprep.subr.mxu0 %v235
    %333 = vmatpush1.msra.mxu0 %v234
    %334 = vmatprep.subr.mxu0 %v233
    %335 = vmatpush1.msra.mxu0 %v232
    %336 = vmatprep.subr.mxu0 %v231
    %337 = vmatpush1.msra.mxu0 %v230
    %338 = vmatprep.subr.mxu0 %v229
    %339 = vmatpush1.msra.mxu0 %v228
    %340 = vmatprep.subr.mxu0 %v227
    %341 = vmatpush1.msra.mxu0 %v226
    %342 = vmatprep.subr.mxu0 %v225
    %343 = vmatpush1.msra.mxu0 %v224
    %344 = vmatprep.subr.mxu0 %v223
    %345 = vmatpush1.msra.mxu0 %v222
    %346 = vmatprep.subr.mxu0 %v221
    %347 = vmatpush1.msra.mxu0 %v220
    %348 = vmatprep.subr.mxu0 %v283
    %349 = vmatpush2.msra.mxu0 %v282
    %350 = vmatprep.subr.mxu0 %v281
    %351 = vmatpush2.msra.mxu0 %v280
    %352 = vmatprep.subr.mxu0 %v279
    %353 = vmatpush2.msra.mxu0 %v278
    %354 = vmatprep.subr.mxu0 %v277
    %355 = vmatpush2.msra.mxu0 %v276
    %356 = vmatprep.subr.mxu0 %v275
    %357 = vmatpush2.msra.mxu0 %v274
    %358 = vmatprep.subr.mxu0 %v273
    %359 = vmatpush2.msra.mxu0 %v272
    %360 = vmatprep.subr.mxu0 %v271
    %361 = vmatpush2.msra.mxu0 %v270
    %362 = vmatprep.subr.mxu0 %v269
    %363 = vmatpush2.msra.mxu0 %v268
    %364 = vmatprep.subr.mxu0 %v267
    %365 = vmatpush2.msra.mxu0 %v266
    %366 = vmatprep.subr.mxu0 %v265
    %367 = vmatpush2.msra.mxu0 %v264
    %368 = vmatprep.subr.mxu0 %v263
    %369 = vmatpush2.msra.mxu0 %v262
    %370 = vmatprep.subr.mxu0 %v261
    %371 = vmatpush2.msra.mxu0 %v260
    %372 = vmatprep.subr.mxu0 %v259
    %373 = vmatpush2.msra.mxu0 %v258
    %374 = vmatprep.subr.mxu0 %v257
    %375 = vmatpush2.msra.mxu0 %v256
    %376 = vmatprep.subr.mxu0 %v255
    %377 = vmatpush2.msra.mxu0 %v254
    %378 = vmatprep.subr.mxu0 %v253
    %379 = vmatpush2.msra.mxu0 %v252
    %380 = vmatprep.mubr.f32.mxu0 %v29
    %381 = vmatmul.mubr.f32.gmra.mxu0 %v28
    %v382 = vpop.f32.mrf.mxu0
    %v383 = vadd.f32 0.0, %v382
    %v384 = vpop.f32.mrf.mxu0
    %v385 = vadd.f32 0.0, %v384
    %386 = vmatprep.mubr.f32.mxu0 %v32
    %387 = vmatmul.mubr.f32.gmra.mxu0 %v31
    %v388 = vpop.f32.mrf.mxu0
    %v389 = vadd.f32 0.0, %v388
    %v390 = vpop.f32.mrf.mxu0
    %v391 = vadd.f32 0.0, %v390
    %392 = vmatprep.mubr.f32.mxu0 %v35
    %393 = vmatmul.mubr.f32.gmra.mxu0 %v34
    %v394 = vpop.f32.mrf.mxu0
    %v395 = vadd.f32 0.0, %v394
    %v396 = vpop.f32.mrf.mxu0
    %v397 = vadd.f32 0.0, %v396
    %398 = vmatprep.mubr.f32.mxu0 %v38
    %399 = vmatmul.mubr.f32.gmra.mxu0 %v37
    %v400 = vpop.f32.mrf.mxu0
    %v401 = vadd.f32 0.0, %v400
    %v402 = vpop.f32.mrf.mxu0
    %v403 = vadd.f32 0.0, %v402
    %404 = vmatprep.mubr.f32.mxu0 %v41
    %405 = vmatmul.mubr.f32.gmra.mxu0 %v40
    %v406 = vpop.f32.mrf.mxu0
    %v407 = vadd.f32 0.0, %v406
    %v408 = vpop.f32.mrf.mxu0
    %v409 = vadd.f32 0.0, %v408
    %410 = vmatprep.mubr.f32.mxu0 %v44
    %411 = vmatmul.mubr.f32.gmra.mxu0 %v43
    %v412 = vpop.f32.mrf.mxu0
    %v413 = vadd.f32 0.0, %v412
    %v414 = vpop.f32.mrf.mxu0
    %v415 = vadd.f32 0.0, %v414
    %416 = vmatprep.mubr.f32.mxu0 %v47
    %417 = vmatmul.mubr.f32.gmra.mxu0 %v46
    %v418 = vpop.f32.mrf.mxu0
    %v419 = vadd.f32 0.0, %v418
    %v420 = vpop.f32.mrf.mxu0
    %v421 = vadd.f32 0.0, %v420
    %422 = vmatprep.mubr.f32.mxu0 %v50
    %423 = vmatmul.mubr.f32.gmra.mxu0 %v49
    %v424 = vpop.f32.mrf.mxu0
    %v425 = vadd.f32 0.0, %v424
    %v426 = vpop.f32.mrf.mxu0
    %v427 = vadd.f32 0.0, %v426
    %428 = vmatprep.mubr.f32.mxu0 %v53
    %429 = vmatmul.mubr.f32.gmra.mxu0 %v52
    %v430 = vpop.f32.mrf.mxu0
    %v431 = vadd.f32 0.0, %v430
    %v432 = vpop.f32.mrf.mxu0
    %v433 = vadd.f32 0.0, %v432
    %434 = vmatprep.mubr.f32.mxu0 %v56
    %435 = vmatmul.mubr.f32.gmra.mxu0 %v55
    %v436 = vpop.f32.mrf.mxu0
    %v437 = vadd.f32 0.0, %v436
    %v438 = vpop.f32.mrf.mxu0
    %v439 = vadd.f32 0.0, %v438
    %440 = vmatprep.mubr.f32.mxu0 %v59
    %441 = vmatmul.mubr.f32.gmra.mxu0 %v58
    %v442 = vpop.f32.mrf.mxu0
    %v443 = vadd.f32 0.0, %v442
    %v444 = vpop.f32.mrf.mxu0
    %v445 = vadd.f32 0.0, %v444
    %446 = vmatprep.mubr.f32.mxu0 %v62
    %447 = vmatmul.mubr.f32.gmra.mxu0 %v61
    %v448 = vpop.f32.mrf.mxu0
    %v449 = vadd.f32 0.0, %v448
    %v450 = vpop.f32.mrf.mxu0
    %v451 = vadd.f32 0.0, %v450
    %452 = vmatprep.mubr.f32.mxu0 %v65
    %453 = vmatmul.mubr.f32.gmra.mxu0 %v64
    %v454 = vpop.f32.mrf.mxu0
    %v455 = vadd.f32 0.0, %v454
    %v456 = vpop.f32.mrf.mxu0
    %v457 = vadd.f32 0.0, %v456
    %458 = vmatprep.mubr.f32.mxu0 %v68
    %459 = vmatmul.mubr.f32.gmra.mxu0 %v67
    %v460 = vpop.f32.mrf.mxu0
    %v461 = vadd.f32 0.0, %v460
    %v462 = vpop.f32.mrf.mxu0
    %v463 = vadd.f32 0.0, %v462
    %464 = vmatprep.mubr.f32.mxu0 %v71
    %465 = vmatmul.mubr.f32.gmra.mxu0 %v70
    %v466 = vpop.f32.mrf.mxu0
    %v467 = vadd.f32 0.0, %v466
    %v468 = vpop.f32.mrf.mxu0
    %v469 = vadd.f32 0.0, %v468
    %470 = vmatprep.mubr.f32.mxu0 %v74
    %471 = vmatmul.mubr.f32.gmra.mxu0 %v73
    %v472 = vpop.f32.mrf.mxu0
    %v473 = vadd.f32 0.0, %v472
    %v474 = vpop.f32.mrf.mxu0
    %v475 = vadd.f32 0.0, %v474
    %476 = vmatprep.mubr.f32.mxu0 %v77
    %477 = vmatmul.mubr.f32.gmra.mxu0 %v76
    %v478 = vpop.f32.mrf.mxu0
    %v479 = vadd.f32 0.0, %v478
    %v480 = vpop.f32.mrf.mxu0
    %v481 = vadd.f32 0.0, %v480
    %482 = vmatprep.mubr.f32.mxu0 %v80
    %483 = vmatmul.mubr.f32.gmra.mxu0 %v79
    %v484 = vpop.f32.mrf.mxu0
    %v485 = vadd.f32 0.0, %v484
    %v486 = vpop.f32.mrf.mxu0
    %v487 = vadd.f32 0.0, %v486
    %488 = vmatprep.mubr.f32.mxu0 %v83
    %489 = vmatmul.mubr.f32.gmra.mxu0 %v82
    %v490 = vpop.f32.mrf.mxu0
    %v491 = vadd.f32 0.0, %v490
    %v492 = vpop.f32.mrf.mxu0
    %v493 = vadd.f32 0.0, %v492
    %494 = vmatprep.mubr.f32.mxu0 %v86
    %495 = vmatmul.mubr.f32.gmra.mxu0 %v85
    %v496 = vpop.f32.mrf.mxu0
    %v497 = vadd.f32 0.0, %v496
    %v498 = vpop.f32.mrf.mxu0
    %v499 = vadd.f32 0.0, %v498
    %500 = vmatprep.mubr.f32.mxu0 %v89
    %501 = vmatmul.mubr.f32.gmra.mxu0 %v88
    %v502 = vpop.f32.mrf.mxu0
    %v503 = vadd.f32 0.0, %v502
    %v504 = vpop.f32.mrf.mxu0
    %v505 = vadd.f32 0.0, %v504
    %506 = vmatprep.mubr.f32.mxu0 %v92
    %507 = vmatmul.mubr.f32.gmra.mxu0 %v91
    %v508 = vpop.f32.mrf.mxu0
    %v509 = vadd.f32 0.0, %v508
    %v510 = vpop.f32.mrf.mxu0
    %v511 = vadd.f32 0.0, %v510
    %512 = vmatprep.mubr.f32.mxu0 %v95
    %513 = vmatmul.mubr.f32.gmra.mxu0 %v94
    %v514 = vpop.f32.mrf.mxu0
    %v515 = vadd.f32 0.0, %v514
    %v516 = vpop.f32.mrf.mxu0
    %v517 = vadd.f32 0.0, %v516
    %518 = vmatprep.mubr.f32.mxu0 %v98
    %519 = vmatmul.mubr.f32.gmra.mxu0 %v97
    %v520 = vpop.f32.mrf.mxu0
    %v521 = vadd.f32 0.0, %v520
    %v522 = vpop.f32.mrf.mxu0
    %v523 = vadd.f32 0.0, %v522
    %524 = vmatprep.mubr.f32.mxu0 %v101
    %525 = vmatmul.mubr.f32.gmra.mxu0 %v100
    %v526 = vpop.f32.mrf.mxu0
    %v527 = vadd.f32 0.0, %v526
    %v528 = vpop.f32.mrf.mxu0
    %v529 = vadd.f32 0.0, %v528
    %530 = vmatprep.mubr.f32.mxu0 %v104
    %531 = vmatmul.mubr.f32.gmra.mxu0 %v103
    %v532 = vpop.f32.mrf.mxu0
    %v533 = vadd.f32 0.0, %v532
    %v534 = vpop.f32.mrf.mxu0
    %v535 = vadd.f32 0.0, %v534
    %536 = vmatprep.mubr.f32.mxu0 %v107
    %537 = vmatmul.mubr.f32.gmra.mxu0 %v106
    %v538 = vpop.f32.mrf.mxu0
    %v539 = vadd.f32 0.0, %v538
    %v540 = vpop.f32.mrf.mxu0
    %v541 = vadd.f32 0.0, %v540
    %542 = vmatprep.mubr.f32.mxu0 %v110
    %543 = vmatmul.mubr.f32.gmra.mxu0 %v109
    %v544 = vpop.f32.mrf.mxu0
    %v545 = vadd.f32 0.0, %v544
    %v546 = vpop.f32.mrf.mxu0
    %v547 = vadd.f32 0.0, %v546
    %548 = vmatprep.mubr.f32.mxu0 %v113
    %549 = vmatmul.mubr.f32.gmra.mxu0 %v112
    %v550 = vpop.f32.mrf.mxu0
    %v551 = vadd.f32 0.0, %v550
    %v552 = vpop.f32.mrf.mxu0
    %v553 = vadd.f32 0.0, %v552
    %554 = vmatprep.mubr.f32.mxu0 %v116
    %555 = vmatmul.mubr.f32.gmra.mxu0 %v115
    %v556 = vpop.f32.mrf.mxu0
    %v557 = vadd.f32 0.0, %v556
    %v558 = vpop.f32.mrf.mxu0
    %v559 = vadd.f32 0.0, %v558
    %560 = vmatprep.mubr.f32.mxu0 %v119
    %561 = vmatmul.mubr.f32.gmra.mxu0 %v118
    %v562 = vpop.f32.mrf.mxu0
    %v563 = vadd.f32 0.0, %v562
    %v564 = vpop.f32.mrf.mxu0
    %v565 = vadd.f32 0.0, %v564
    %566 = vmatprep.mubr.f32.mxu0 %v122
    %567 = vmatmul.mubr.f32.gmra.mxu0 %v121
    %v568 = vpop.f32.mrf.mxu0
    %v569 = vadd.f32 0.0, %v568
    %v570 = vpop.f32.mrf.mxu0
    %v571 = vadd.f32 0.0, %v570
    %572 = vmatprep.mubr.f32.mxu0 %v125
    %573 = vmatmul.mubr.f32.gmra.mxu0 %v124
    %v574 = vpop.f32.mrf.mxu0
    %v575 = vadd.f32 0.0, %v574
    %v576 = vpop.f32.mrf.mxu0
    %v577 = vadd.f32 0.0, %v576
    %578 = vmatprep.mubr.f32.mxu0 %v128
    %579 = vmatmul.mubr.f32.gmra.mxu0 %v127
    %v580 = vpop.f32.mrf.mxu0
    %v581 = vadd.f32 0.0, %v580
    %v582 = vpop.f32.mrf.mxu0
    %v583 = vadd.f32 0.0, %v582
    %584 = vmatprep.mubr.f32.mxu0 %v131
    %585 = vmatmul.mubr.f32.gmra.mxu0 %v130
    %v586 = vpop.f32.mrf.mxu0
    %v587 = vadd.f32 0.0, %v586
    %v588 = vpop.f32.mrf.mxu0
    %v589 = vadd.f32 0.0, %v588
    %590 = vmatprep.mubr.f32.mxu0 %v134
    %591 = vmatmul.mubr.f32.gmra.mxu0 %v133
    %v592 = vpop.f32.mrf.mxu0
    %v593 = vadd.f32 0.0, %v592
    %v594 = vpop.f32.mrf.mxu0
    %v595 = vadd.f32 0.0, %v594
    %596 = vmatprep.mubr.f32.mxu0 %v137
    %597 = vmatmul.mubr.f32.gmra.mxu0 %v136
    %v598 = vpop.f32.mrf.mxu0
    %v599 = vadd.f32 0.0, %v598
    %v600 = vpop.f32.mrf.mxu0
    %v601 = vadd.f32 0.0, %v600
    %602 = vmatprep.mubr.f32.mxu0 %v140
    %603 = vmatmul.mubr.f32.gmra.mxu0 %v139
    %v604 = vpop.f32.mrf.mxu0
    %v605 = vadd.f32 0.0, %v604
    %v606 = vpop.f32.mrf.mxu0
    %v607 = vadd.f32 0.0, %v606
    %608 = vmatprep.mubr.f32.mxu0 %v143
    %609 = vmatmul.mubr.f32.gmra.mxu0 %v142
    %v610 = vpop.f32.mrf.mxu0
    %v611 = vadd.f32 0.0, %v610
    %v612 = vpop.f32.mrf.mxu0
    %v613 = vadd.f32 0.0, %v612
    %614 = vmatprep.mubr.f32.mxu0 %v146
    %615 = vmatmul.mubr.f32.gmra.mxu0 %v145
    %v616 = vpop.f32.mrf.mxu0
    %v617 = vadd.f32 0.0, %v616
    %v618 = vpop.f32.mrf.mxu0
    %v619 = vadd.f32 0.0, %v618
    %620 = vmatprep.mubr.f32.mxu0 %v149
    %621 = vmatmul.mubr.f32.gmra.mxu0 %v148
    %v622 = vpop.f32.mrf.mxu0
    %v623 = vadd.f32 0.0, %v622
    %v624 = vpop.f32.mrf.mxu0
    %v625 = vadd.f32 0.0, %v624
    %626 = vmatprep.mubr.f32.mxu0 %v152
    %627 = vmatmul.mubr.f32.gmra.mxu0 %v151
    %v628 = vpop.f32.mrf.mxu0
    %v629 = vadd.f32 0.0, %v628
    %v630 = vpop.f32.mrf.mxu0
    %v631 = vadd.f32 0.0, %v630
    %632 = vmatprep.mubr.f32.mxu0 %v155
    %633 = vmatmul.mubr.f32.gmra.mxu0 %v154
    %v634 = vpop.f32.mrf.mxu0
    %v635 = vadd.f32 0.0, %v634
    %v636 = vpop.f32.mrf.mxu0
    %v637 = vadd.f32 0.0, %v636
    %638 = vmatprep.mubr.f32.mxu0 %v158
    %639 = vmatmul.mubr.f32.gmra.mxu0 %v157
    %v640 = vpop.f32.mrf.mxu0
    %v641 = vadd.f32 0.0, %v640
    %v642 = vpop.f32.mrf.mxu0
    %v643 = vadd.f32 0.0, %v642
    %644 = vmatprep.mubr.f32.mxu0 %v161
    %645 = vmatmul.mubr.f32.gmra.mxu0 %v160
    %v646 = vpop.f32.mrf.mxu0
    %v647 = vadd.f32 0.0, %v646
    %v648 = vpop.f32.mrf.mxu0
    %v649 = vadd.f32 0.0, %v648
    %650 = vmatprep.mubr.f32.mxu0 %v164
    %651 = vmatmul.mubr.f32.gmra.mxu0 %v163
    %v652 = vpop.f32.mrf.mxu0
    %v653 = vadd.f32 0.0, %v652
    %v654 = vpop.f32.mrf.mxu0
    %v655 = vadd.f32 0.0, %v654
    %656 = vmatprep.mubr.f32.mxu0 %v167
    %657 = vmatmul.mubr.f32.gmra.mxu0 %v166
    %v658 = vpop.f32.mrf.mxu0
    %v659 = vadd.f32 0.0, %v658
    %v660 = vpop.f32.mrf.mxu0
    %v661 = vadd.f32 0.0, %v660
    %662 = vmatprep.mubr.f32.mxu0 %v170
    %663 = vmatmul.mubr.f32.gmra.mxu0 %v169
    %v664 = vpop.f32.mrf.mxu0
    %v665 = vadd.f32 0.0, %v664
    %v666 = vpop.f32.mrf.mxu0
    %v667 = vadd.f32 0.0, %v666
    %668 = vmatprep.mubr.f32.mxu0 %v173
    %669 = vmatmul.mubr.f32.gmra.mxu0 %v172
    %v670 = vpop.f32.mrf.mxu0
    %v671 = vadd.f32 0.0, %v670
    %v672 = vpop.f32.mrf.mxu0
    %v673 = vadd.f32 0.0, %v672
    %674 = vmatprep.mubr.f32.mxu0 %v176
    %675 = vmatmul.mubr.f32.gmra.mxu0 %v175
    %v676 = vpop.f32.mrf.mxu0
    %v677 = vadd.f32 0.0, %v676
    %v678 = vpop.f32.mrf.mxu0
    %v679 = vadd.f32 0.0, %v678
    %680 = vmatprep.mubr.f32.mxu0 %v179
    %681 = vmatmul.mubr.f32.gmra.mxu0 %v178
    %v682 = vpop.f32.mrf.mxu0
    %v683 = vadd.f32 0.0, %v682
    %v684 = vpop.f32.mrf.mxu0
    %v685 = vadd.f32 0.0, %v684
    %686 = vmatprep.mubr.f32.mxu0 %v182
    %687 = vmatmul.mubr.f32.gmra.mxu0 %v181
    %v688 = vpop.f32.mrf.mxu0
    %v689 = vadd.f32 0.0, %v688
    %v690 = vpop.f32.mrf.mxu0
    %v691 = vadd.f32 0.0, %v690
    %692 = vmatprep.mubr.f32.mxu0 %v185
    %693 = vmatmul.mubr.f32.gmra.mxu0 %v184
    %v694 = vpop.f32.mrf.mxu0
    %v695 = vadd.f32 0.0, %v694
    %v696 = vpop.f32.mrf.mxu0
    %v697 = vadd.f32 0.0, %v696
    %698 = vmatprep.mubr.f32.mxu0 %v188
    %699 = vmatmul.mubr.f32.gmra.mxu0 %v187
    %v700 = vpop.f32.mrf.mxu0
    %v701 = vadd.f32 0.0, %v700
    %v702 = vpop.f32.mrf.mxu0
    %v703 = vadd.f32 0.0, %v702
    %704 = vmatprep.mubr.f32.mxu0 %v191
    %705 = vmatmul.mubr.f32.gmra.mxu0 %v190
    %v706 = vpop.f32.mrf.mxu0
    %v707 = vadd.f32 0.0, %v706
    %v708 = vpop.f32.mrf.mxu0
    %v709 = vadd.f32 0.0, %v708
    %710 = vmatprep.mubr.f32.mxu0 %v194
    %711 = vmatmul.mubr.f32.gmra.mxu0 %v193
    %v712 = vpop.f32.mrf.mxu0
    %v713 = vadd.f32 0.0, %v712
    %v714 = vpop.f32.mrf.mxu0
    %v715 = vadd.f32 0.0, %v714
    %716 = vmatprep.mubr.f32.mxu0 %v197
    %717 = vmatmul.mubr.f32.gmra.mxu0 %v196
    %v718 = vpop.f32.mrf.mxu0
    %v719 = vadd.f32 0.0, %v718
    %v720 = vpop.f32.mrf.mxu0
    %v721 = vadd.f32 0.0, %v720
    %722 = vmatprep.mubr.f32.mxu0 %v200
    %723 = vmatmul.mubr.f32.gmra.mxu0 %v199
    %v724 = vpop.f32.mrf.mxu0
    %v725 = vadd.f32 0.0, %v724
    %v726 = vpop.f32.mrf.mxu0
    %v727 = vadd.f32 0.0, %v726
    %728 = vmatprep.mubr.f32.mxu0 %v203
    %729 = vmatmul.mubr.f32.gmra.mxu0 %v202
    %v730 = vpop.f32.mrf.mxu0
    %v731 = vadd.f32 0.0, %v730
    %v732 = vpop.f32.mrf.mxu0
    %v733 = vadd.f32 0.0, %v732
    %734 = vmatprep.mubr.f32.mxu0 %v206
    %735 = vmatmul.mubr.f32.gmra.mxu0 %v205
    %v736 = vpop.f32.mrf.mxu0
    %v737 = vadd.f32 0.0, %v736
    %v738 = vpop.f32.mrf.mxu0
    %v739 = vadd.f32 0.0, %v738
    %740 = vmatprep.mubr.f32.mxu0 %v209
    %741 = vmatmul.mubr.f32.gmra.mxu0 %v208
    %v742 = vpop.f32.mrf.mxu0
    %v743 = vadd.f32 0.0, %v742
    %v744 = vpop.f32.mrf.mxu0
    %v745 = vadd.f32 0.0, %v744
    %746 = vmatprep.mubr.f32.mxu0 %v212
    %747 = vmatmul.mubr.f32.gmra.mxu0 %v211
    %v748 = vpop.f32.mrf.mxu0
    %v749 = vadd.f32 0.0, %v748
    %v750 = vpop.f32.mrf.mxu0
    %v751 = vadd.f32 0.0, %v750
    %752 = vmatprep.mubr.f32.mxu0 %v215
    %753 = vmatmul.mubr.f32.gmra.mxu0 %v214
    %v754 = vpop.f32.mrf.mxu0
    %v755 = vadd.f32 0.0, %v754
    %v756 = vpop.f32.mrf.mxu0
    %v757 = vadd.f32 0.0, %v756
    %758 = vmatprep.mubr.f32.mxu0 %v218
    %759 = vmatmul.mubr.f32.gmra.mxu0 %v217
    %v760 = vpop.f32.mrf.mxu0
    %v761 = vadd.f32 0.0, %v760
    %v762 = vpop.f32.mrf.mxu0
    %v763 = vadd.f32 0.0, %v762
    %764 = vdwg.mxu0
    %765 = vmatprep.subr.mxu0 %v315
    %766 = vmatpush1.msra.mxu0 %v314
    %767 = vmatprep.subr.mxu0 %v313
    %768 = vmatpush1.msra.mxu0 %v312
    %769 = vmatprep.subr.mxu0 %v311
    %770 = vmatpush1.msra.mxu0 %v310
    %771 = vmatprep.subr.mxu0 %v309
    %772 = vmatpush1.msra.mxu0 %v308
    %773 = vmatprep.subr.mxu0 %v307
    %774 = vmatpush1.msra.mxu0 %v306
    %775 = vmatprep.subr.mxu0 %v305
    %776 = vmatpush1.msra.mxu0 %v304
    %777 = vmatprep.subr.mxu0 %v303
    %778 = vmatpush1.msra.mxu0 %v302
    %779 = vmatprep.subr.mxu0 %v301
    %780 = vmatpush1.msra.mxu0 %v300
    %781 = vmatprep.subr.mxu0 %v299
    %782 = vmatpush1.msra.mxu0 %v298
    %783 = vmatprep.subr.mxu0 %v297
    %784 = vmatpush1.msra.mxu0 %v296
    %785 = vmatprep.subr.mxu0 %v295
    %786 = vmatpush1.msra.mxu0 %v294
    %787 = vmatprep.subr.mxu0 %v293
    %788 = vmatpush1.msra.mxu0 %v292
    %789 = vmatprep.subr.mxu0 %v291
    %790 = vmatpush1.msra.mxu0 %v290
    %791 = vmatprep.subr.mxu0 %v289
    %792 = vmatpush1.msra.mxu0 %v288
    %793 = vmatprep.subr.mxu0 %v287
    %794 = vmatpush1.msra.mxu0 %v286
    %795 = vmatprep.subr.mxu0 %v285
    %796 = vmatpush1.msra.mxu0 %v284
    %797 = vmatprep.subr.mxu0 0.0
    %798 = vmatpush2.msra.mxu0 0.0
    %799 = vmatprep.subr.mxu0 0.0
    %800 = vmatpush2.msra.mxu0 0.0
    %801 = vmatprep.subr.mxu0 0.0
    %802 = vmatpush2.msra.mxu0 0.0
    %803 = vmatprep.subr.mxu0 0.0
    %804 = vmatpush2.msra.mxu0 0.0
    %805 = vmatprep.subr.mxu0 0.0
    %806 = vmatpush2.msra.mxu0 0.0
    %807 = vmatprep.subr.mxu0 0.0
    %808 = vmatpush2.msra.mxu0 0.0
    %809 = vmatprep.subr.mxu0 0.0
    %810 = vmatpush2.msra.mxu0 0.0
    %811 = vmatprep.subr.mxu0 0.0
    %812 = vmatpush2.msra.mxu0 0.0
    %813 = vmatprep.subr.mxu0 0.0
    %814 = vmatpush2.msra.mxu0 0.0
    %815 = vmatprep.subr.mxu0 0.0
    %816 = vmatpush2.msra.mxu0 0.0
    %817 = vmatprep.subr.mxu0 0.0
    %818 = vmatpush2.msra.mxu0 0.0
    %819 = vmatprep.subr.mxu0 0.0
    %820 = vmatpush2.msra.mxu0 0.0
    %821 = vmatprep.subr.mxu0 0.0
    %822 = vmatpush2.msra.mxu0 0.0
    %823 = vmatprep.subr.mxu0 0.0
    %824 = vmatpush2.msra.mxu0 0.0
    %825 = vmatprep.subr.mxu0 0.0
    %826 = vmatpush2.msra.mxu0 0.0
    %827 = vmatprep.subr.mxu0 0.0
    %828 = vmatpush2.msra.mxu0 0.0
    %829 = vmatprep.mubr.f32.mxu0 0.0
    %830 = vmatmul.mubr.f32.gmra.mxu0 %v30
    %v831 = vpop.f32.mrf.mxu0
    %v832 = vadd.f32 %v383, %v831
    %v833 = vpop.f32.mrf.mxu0
    %v834 = vadd.f32 %v385, %v833
    %835 = vmatprep.mubr.f32.mxu0 0.0
    %836 = vmatmul.mubr.f32.gmra.mxu0 %v33
    %v837 = vpop.f32.mrf.mxu0
    %v838 = vadd.f32 %v389, %v837
    %v839 = vpop.f32.mrf.mxu0
    %v840 = vadd.f32 %v391, %v839
    %841 = vmatprep.mubr.f32.mxu0 0.0
    %842 = vmatmul.mubr.f32.gmra.mxu0 %v36
    %v843 = vpop.f32.mrf.mxu0
    %v844 = vadd.f32 %v395, %v843
    %v845 = vpop.f32.mrf.mxu0
    %v846 = vadd.f32 %v397, %v845
    %847 = vmatprep.mubr.f32.mxu0 0.0
    %848 = vmatmul.mubr.f32.gmra.mxu0 %v39
    %v849 = vpop.f32.mrf.mxu0
    %v850 = vadd.f32 %v401, %v849
    %v851 = vpop.f32.mrf.mxu0
    %v852 = vadd.f32 %v403, %v851
    %853 = vmatprep.mubr.f32.mxu0 0.0
    %854 = vmatmul.mubr.f32.gmra.mxu0 %v42
    %v855 = vpop.f32.mrf.mxu0
    %v856 = vadd.f32 %v407, %v855
    %v857 = vpop.f32.mrf.mxu0
    %v858 = vadd.f32 %v409, %v857
    %859 = vmatprep.mubr.f32.mxu0 0.0
    %860 = vmatmul.mubr.f32.gmra.mxu0 %v45
    %v861 = vpop.f32.mrf.mxu0
    %v862 = vadd.f32 %v413, %v861
    %v863 = vpop.f32.mrf.mxu0
    %v864 = vadd.f32 %v415, %v863
    %865 = vmatprep.mubr.f32.mxu0 0.0
    %866 = vmatmul.mubr.f32.gmra.mxu0 %v48
    %v867 = vpop.f32.mrf.mxu0
    %v868 = vadd.f32 %v419, %v867
    %v869 = vpop.f32.mrf.mxu0
    %v870 = vadd.f32 %v421, %v869
    %871 = vmatprep.mubr.f32.mxu0 0.0
    %872 = vmatmul.mubr.f32.gmra.mxu0 %v51
    %v873 = vpop.f32.mrf.mxu0
    %v874 = vadd.f32 %v425, %v873
    %v875 = vpop.f32.mrf.mxu0
    %v876 = vadd.f32 %v427, %v875
    %877 = vmatprep.mubr.f32.mxu0 0.0
    %878 = vmatmul.mubr.f32.gmra.mxu0 %v54
    %v879 = vpop.f32.mrf.mxu0
    %v880 = vadd.f32 %v431, %v879
    %v881 = vpop.f32.mrf.mxu0
    %v882 = vadd.f32 %v433, %v881
    %883 = vmatprep.mubr.f32.mxu0 0.0
    %884 = vmatmul.mubr.f32.gmra.mxu0 %v57
    %v885 = vpop.f32.mrf.mxu0
    %v886 = vadd.f32 %v437, %v885
    %v887 = vpop.f32.mrf.mxu0
    %v888 = vadd.f32 %v439, %v887
    %889 = vmatprep.mubr.f32.mxu0 0.0
    %890 = vmatmul.mubr.f32.gmra.mxu0 %v60
    %v891 = vpop.f32.mrf.mxu0
    %v892 = vadd.f32 %v443, %v891
    %v893 = vpop.f32.mrf.mxu0
    %v894 = vadd.f32 %v445, %v893
    %895 = vmatprep.mubr.f32.mxu0 0.0
    %896 = vmatmul.mubr.f32.gmra.mxu0 %v63
    %v897 = vpop.f32.mrf.mxu0
    %v898 = vadd.f32 %v449, %v897
    %v899 = vpop.f32.mrf.mxu0
    %v900 = vadd.f32 %v451, %v899
    %901 = vmatprep.mubr.f32.mxu0 0.0
    %902 = vmatmul.mubr.f32.gmra.mxu0 %v66
    %v903 = vpop.f32.mrf.mxu0
    %v904 = vadd.f32 %v455, %v903
    %v905 = vpop.f32.mrf.mxu0
    %v906 = vadd.f32 %v457, %v905
    %907 = vmatprep.mubr.f32.mxu0 0.0
    %908 = vmatmul.mubr.f32.gmra.mxu0 %v69
    %v909 = vpop.f32.mrf.mxu0
    %v910 = vadd.f32 %v461, %v909
    %v911 = vpop.f32.mrf.mxu0
    %v912 = vadd.f32 %v463, %v911
    %913 = vmatprep.mubr.f32.mxu0 0.0
    %914 = vmatmul.mubr.f32.gmra.mxu0 %v72
    %v915 = vpop.f32.mrf.mxu0
    %v916 = vadd.f32 %v467, %v915
    %v917 = vpop.f32.mrf.mxu0
    %v918 = vadd.f32 %v469, %v917
    %919 = vmatprep.mubr.f32.mxu0 0.0
    %920 = vmatmul.mubr.f32.gmra.mxu0 %v75
    %v921 = vpop.f32.mrf.mxu0
    %v922 = vadd.f32 %v473, %v921
    %v923 = vpop.f32.mrf.mxu0
    %v924 = vadd.f32 %v475, %v923
    %925 = vmatprep.mubr.f32.mxu0 0.0
    %926 = vmatmul.mubr.f32.gmra.mxu0 %v78
    %v927 = vpop.f32.mrf.mxu0
    %v928 = vadd.f32 %v479, %v927
    %v929 = vpop.f32.mrf.mxu0
    %v930 = vadd.f32 %v481, %v929
    %931 = vmatprep.mubr.f32.mxu0 0.0
    %932 = vmatmul.mubr.f32.gmra.mxu0 %v81
    %v933 = vpop.f32.mrf.mxu0
    %v934 = vadd.f32 %v485, %v933
    %v935 = vpop.f32.mrf.mxu0
    %v936 = vadd.f32 %v487, %v935
    %937 = vmatprep.mubr.f32.mxu0 0.0
    %938 = vmatmul.mubr.f32.gmra.mxu0 %v84
    %v939 = vpop.f32.mrf.mxu0
    %v940 = vadd.f32 %v491, %v939
    %v941 = vpop.f32.mrf.mxu0
    %v942 = vadd.f32 %v493, %v941
    %943 = vmatprep.mubr.f32.mxu0 0.0
    %944 = vmatmul.mubr.f32.gmra.mxu0 %v87
    %v945 = vpop.f32.mrf.mxu0
    %v946 = vadd.f32 %v497, %v945
    %v947 = vpop.f32.mrf.mxu0
    %v948 = vadd.f32 %v499, %v947
    %949 = vmatprep.mubr.f32.mxu0 0.0
    %950 = vmatmul.mubr.f32.gmra.mxu0 %v90
    %v951 = vpop.f32.mrf.mxu0
    %v952 = vadd.f32 %v503, %v951
    %v953 = vpop.f32.mrf.mxu0
    %v954 = vadd.f32 %v505, %v953
    %955 = vmatprep.mubr.f32.mxu0 0.0
    %956 = vmatmul.mubr.f32.gmra.mxu0 %v93
    %v957 = vpop.f32.mrf.mxu0
    %v958 = vadd.f32 %v509, %v957
    %v959 = vpop.f32.mrf.mxu0
    %v960 = vadd.f32 %v511, %v959
    %961 = vmatprep.mubr.f32.mxu0 0.0
    %962 = vmatmul.mubr.f32.gmra.mxu0 %v96
    %v963 = vpop.f32.mrf.mxu0
    %v964 = vadd.f32 %v515, %v963
    %v965 = vpop.f32.mrf.mxu0
    %v966 = vadd.f32 %v517, %v965
    %967 = vmatprep.mubr.f32.mxu0 0.0
    %968 = vmatmul.mubr.f32.gmra.mxu0 %v99
    %v969 = vpop.f32.mrf.mxu0
    %v970 = vadd.f32 %v521, %v969
    %v971 = vpop.f32.mrf.mxu0
    %v972 = vadd.f32 %v523, %v971
    %973 = vmatprep.mubr.f32.mxu0 0.0
    %974 = vmatmul.mubr.f32.gmra.mxu0 %v102
    %v975 = vpop.f32.mrf.mxu0
    %v976 = vadd.f32 %v527, %v975
    %v977 = vpop.f32.mrf.mxu0
    %v978 = vadd.f32 %v529, %v977
    %979 = vmatprep.mubr.f32.mxu0 0.0
    %980 = vmatmul.mubr.f32.gmra.mxu0 %v105
    %v981 = vpop.f32.mrf.mxu0
    %v982 = vadd.f32 %v533, %v981
    %v983 = vpop.f32.mrf.mxu0
    %v984 = vadd.f32 %v535, %v983
    %985 = vmatprep.mubr.f32.mxu0 0.0
    %986 = vmatmul.mubr.f32.gmra.mxu0 %v108
    %v987 = vpop.f32.mrf.mxu0
    %v988 = vadd.f32 %v539, %v987
    %v989 = vpop.f32.mrf.mxu0
    %v990 = vadd.f32 %v541, %v989
    %991 = vmatprep.mubr.f32.mxu0 0.0
    %992 = vmatmul.mubr.f32.gmra.mxu0 %v111
    %v993 = vpop.f32.mrf.mxu0
    %v994 = vadd.f32 %v545, %v993
    %v995 = vpop.f32.mrf.mxu0
    %v996 = vadd.f32 %v547, %v995
    %997 = vmatprep.mubr.f32.mxu0 0.0
    %998 = vmatmul.mubr.f32.gmra.mxu0 %v114
    %v999 = vpop.f32.mrf.mxu0
    %v1000 = vadd.f32 %v551, %v999
    %v1001 = vpop.f32.mrf.mxu0
    %v1002 = vadd.f32 %v553, %v1001
    %1003 = vmatprep.mubr.f32.mxu0 0.0
    %1004 = vmatmul.mubr.f32.gmra.mxu0 %v117
    %v1005 = vpop.f32.mrf.mxu0
    %v1006 = vadd.f32 %v557, %v1005
    %v1007 = vpop.f32.mrf.mxu0
    %v1008 = vadd.f32 %v559, %v1007
    %1009 = vmatprep.mubr.f32.mxu0 0.0
    %1010 = vmatmul.mubr.f32.gmra.mxu0 %v120
    %v1011 = vpop.f32.mrf.mxu0
    %v1012 = vadd.f32 %v563, %v1011
    %v1013 = vpop.f32.mrf.mxu0
    %v1014 = vadd.f32 %v565, %v1013
    %1015 = vmatprep.mubr.f32.mxu0 0.0
    %1016 = vmatmul.mubr.f32.gmra.mxu0 %v123
    %v1017 = vpop.f32.mrf.mxu0
    %v1018 = vadd.f32 %v569, %v1017
    %v1019 = vpop.f32.mrf.mxu0
    %v1020 = vadd.f32 %v571, %v1019
    %1021 = vmatprep.mubr.f32.mxu0 0.0
    %1022 = vmatmul.mubr.f32.gmra.mxu0 %v126
    %v1023 = vpop.f32.mrf.mxu0
    %v1024 = vadd.f32 %v575, %v1023
    %v1025 = vpop.f32.mrf.mxu0
    %v1026 = vadd.f32 %v577, %v1025
    %1027 = vmatprep.mubr.f32.mxu0 0.0
    %1028 = vmatmul.mubr.f32.gmra.mxu0 %v129
    %v1029 = vpop.f32.mrf.mxu0
    %v1030 = vadd.f32 %v581, %v1029
    %v1031 = vpop.f32.mrf.mxu0
    %v1032 = vadd.f32 %v583, %v1031
    %1033 = vmatprep.mubr.f32.mxu0 0.0
    %1034 = vmatmul.mubr.f32.gmra.mxu0 %v132
    %v1035 = vpop.f32.mrf.mxu0
    %v1036 = vadd.f32 %v587, %v1035
    %v1037 = vpop.f32.mrf.mxu0
    %v1038 = vadd.f32 %v589, %v1037
    %1039 = vmatprep.mubr.f32.mxu0 0.0
    %1040 = vmatmul.mubr.f32.gmra.mxu0 %v135
    %v1041 = vpop.f32.mrf.mxu0
    %v1042 = vadd.f32 %v593, %v1041
    %v1043 = vpop.f32.mrf.mxu0
    %v1044 = vadd.f32 %v595, %v1043
    %1045 = vmatprep.mubr.f32.mxu0 0.0
    %1046 = vmatmul.mubr.f32.gmra.mxu0 %v138
    %v1047 = vpop.f32.mrf.mxu0
    %v1048 = vadd.f32 %v599, %v1047
    %v1049 = vpop.f32.mrf.mxu0
    %v1050 = vadd.f32 %v601, %v1049
    %1051 = vmatprep.mubr.f32.mxu0 0.0
    %1052 = vmatmul.mubr.f32.gmra.mxu0 %v141
    %v1053 = vpop.f32.mrf.mxu0
    %v1054 = vadd.f32 %v605, %v1053
    %v1055 = vpop.f32.mrf.mxu0
    %v1056 = vadd.f32 %v607, %v1055
    %1057 = vmatprep.mubr.f32.mxu0 0.0
    %1058 = vmatmul.mubr.f32.gmra.mxu0 %v144
    %v1059 = vpop.f32.mrf.mxu0
    %v1060 = vadd.f32 %v611, %v1059
    %v1061 = vpop.f32.mrf.mxu0
    %v1062 = vadd.f32 %v613, %v1061
    %1063 = vmatprep.mubr.f32.mxu0 0.0
    %1064 = vmatmul.mubr.f32.gmra.mxu0 %v147
    %v1065 = vpop.f32.mrf.mxu0
    %v1066 = vadd.f32 %v617, %v1065
    %v1067 = vpop.f32.mrf.mxu0
    %v1068 = vadd.f32 %v619, %v1067
    %1069 = vmatprep.mubr.f32.mxu0 0.0
    %1070 = vmatmul.mubr.f32.gmra.mxu0 %v150
    %v1071 = vpop.f32.mrf.mxu0
    %v1072 = vadd.f32 %v623, %v1071
    %v1073 = vpop.f32.mrf.mxu0
    %v1074 = vadd.f32 %v625, %v1073
    %1075 = vmatprep.mubr.f32.mxu0 0.0
    %1076 = vmatmul.mubr.f32.gmra.mxu0 %v153
    %v1077 = vpop.f32.mrf.mxu0
    %v1078 = vadd.f32 %v629, %v1077
    %v1079 = vpop.f32.mrf.mxu0
    %v1080 = vadd.f32 %v631, %v1079
    %1081 = vmatprep.mubr.f32.mxu0 0.0
    %1082 = vmatmul.mubr.f32.gmra.mxu0 %v156
    %v1083 = vpop.f32.mrf.mxu0
    %v1084 = vadd.f32 %v635, %v1083
    %v1085 = vpop.f32.mrf.mxu0
    %v1086 = vadd.f32 %v637, %v1085
    %1087 = vmatprep.mubr.f32.mxu0 0.0
    %1088 = vmatmul.mubr.f32.gmra.mxu0 %v159
    %v1089 = vpop.f32.mrf.mxu0
    %v1090 = vadd.f32 %v641, %v1089
    %v1091 = vpop.f32.mrf.mxu0
    %v1092 = vadd.f32 %v643, %v1091
    %1093 = vmatprep.mubr.f32.mxu0 0.0
    %1094 = vmatmul.mubr.f32.gmra.mxu0 %v162
    %v1095 = vpop.f32.mrf.mxu0
    %v1096 = vadd.f32 %v647, %v1095
    %v1097 = vpop.f32.mrf.mxu0
    %v1098 = vadd.f32 %v649, %v1097
    %1099 = vmatprep.mubr.f32.mxu0 0.0
    %1100 = vmatmul.mubr.f32.gmra.mxu0 %v165
    %v1101 = vpop.f32.mrf.mxu0
    %v1102 = vadd.f32 %v653, %v1101
    %v1103 = vpop.f32.mrf.mxu0
    %v1104 = vadd.f32 %v655, %v1103
    %1105 = vmatprep.mubr.f32.mxu0 0.0
    %1106 = vmatmul.mubr.f32.gmra.mxu0 %v168
    %v1107 = vpop.f32.mrf.mxu0
    %v1108 = vadd.f32 %v659, %v1107
    %v1109 = vpop.f32.mrf.mxu0
    %v1110 = vadd.f32 %v661, %v1109
    %1111 = vmatprep.mubr.f32.mxu0 0.0
    %1112 = vmatmul.mubr.f32.gmra.mxu0 %v171
    %v1113 = vpop.f32.mrf.mxu0
    %v1114 = vadd.f32 %v665, %v1113
    %v1115 = vpop.f32.mrf.mxu0
    %v1116 = vadd.f32 %v667, %v1115
    %1117 = vmatprep.mubr.f32.mxu0 0.0
    %1118 = vmatmul.mubr.f32.gmra.mxu0 %v174
    %v1119 = vpop.f32.mrf.mxu0
    %v1120 = vadd.f32 %v671, %v1119
    %v1121 = vpop.f32.mrf.mxu0
    %v1122 = vadd.f32 %v673, %v1121
    %1123 = vmatprep.mubr.f32.mxu0 0.0
    %1124 = vmatmul.mubr.f32.gmra.mxu0 %v177
    %v1125 = vpop.f32.mrf.mxu0
    %v1126 = vadd.f32 %v677, %v1125
    %v1127 = vpop.f32.mrf.mxu0
    %v1128 = vadd.f32 %v679, %v1127
    %1129 = vmatprep.mubr.f32.mxu0 0.0
    %1130 = vmatmul.mubr.f32.gmra.mxu0 %v180
    %v1131 = vpop.f32.mrf.mxu0
    %v1132 = vadd.f32 %v683, %v1131
    %v1133 = vpop.f32.mrf.mxu0
    %v1134 = vadd.f32 %v685, %v1133
    %1135 = vmatprep.mubr.f32.mxu0 0.0
    %1136 = vmatmul.mubr.f32.gmra.mxu0 %v183
    %v1137 = vpop.f32.mrf.mxu0
    %v1138 = vadd.f32 %v689, %v1137
    %v1139 = vpop.f32.mrf.mxu0
    %v1140 = vadd.f32 %v691, %v1139
    %1141 = vmatprep.mubr.f32.mxu0 0.0
    %1142 = vmatmul.mubr.f32.gmra.mxu0 %v186
    %v1143 = vpop.f32.mrf.mxu0
    %v1144 = vadd.f32 %v695, %v1143
    %v1145 = vpop.f32.mrf.mxu0
    %v1146 = vadd.f32 %v697, %v1145
    %1147 = vmatprep.mubr.f32.mxu0 0.0
    %1148 = vmatmul.mubr.f32.gmra.mxu0 %v189
    %v1149 = vpop.f32.mrf.mxu0
    %v1150 = vadd.f32 %v701, %v1149
    %v1151 = vpop.f32.mrf.mxu0
    %v1152 = vadd.f32 %v703, %v1151
    %1153 = vmatprep.mubr.f32.mxu0 0.0
    %1154 = vmatmul.mubr.f32.gmra.mxu0 %v192
    %v1155 = vpop.f32.mrf.mxu0
    %v1156 = vadd.f32 %v707, %v1155
    %v1157 = vpop.f32.mrf.mxu0
    %v1158 = vadd.f32 %v709, %v1157
    %1159 = vmatprep.mubr.f32.mxu0 0.0
    %1160 = vmatmul.mubr.f32.gmra.mxu0 %v195
    %v1161 = vpop.f32.mrf.mxu0
    %v1162 = vadd.f32 %v713, %v1161
    %v1163 = vpop.f32.mrf.mxu0
    %v1164 = vadd.f32 %v715, %v1163
    %1165 = vmatprep.mubr.f32.mxu0 0.0
    %1166 = vmatmul.mubr.f32.gmra.mxu0 %v198
    %v1167 = vpop.f32.mrf.mxu0
    %v1168 = vadd.f32 %v719, %v1167
    %v1169 = vpop.f32.mrf.mxu0
    %v1170 = vadd.f32 %v721, %v1169
    %1171 = vmatprep.mubr.f32.mxu0 0.0
    %1172 = vmatmul.mubr.f32.gmra.mxu0 %v201
    %v1173 = vpop.f32.mrf.mxu0
    %v1174 = vadd.f32 %v725, %v1173
    %v1175 = vpop.f32.mrf.mxu0
    %v1176 = vadd.f32 %v727, %v1175
    %1177 = vmatprep.mubr.f32.mxu0 0.0
    %1178 = vmatmul.mubr.f32.gmra.mxu0 %v204
    %v1179 = vpop.f32.mrf.mxu0
    %v1180 = vadd.f32 %v731, %v1179
    %v1181 = vpop.f32.mrf.mxu0
    %v1182 = vadd.f32 %v733, %v1181
    %1183 = vmatprep.mubr.f32.mxu0 0.0
    %1184 = vmatmul.mubr.f32.gmra.mxu0 %v207
    %v1185 = vpop.f32.mrf.mxu0
    %v1186 = vadd.f32 %v737, %v1185
    %v1187 = vpop.f32.mrf.mxu0
    %v1188 = vadd.f32 %v739, %v1187
    %1189 = vmatprep.mubr.f32.mxu0 0.0
    %1190 = vmatmul.mubr.f32.gmra.mxu0 %v210
    %v1191 = vpop.f32.mrf.mxu0
    %v1192 = vadd.f32 %v743, %v1191
    %v1193 = vpop.f32.mrf.mxu0
    %v1194 = vadd.f32 %v745, %v1193
    %1195 = vmatprep.mubr.f32.mxu0 0.0
    %1196 = vmatmul.mubr.f32.gmra.mxu0 %v213
    %v1197 = vpop.f32.mrf.mxu0
    %v1198 = vadd.f32 %v749, %v1197
    %v1199 = vpop.f32.mrf.mxu0
    %v1200 = vadd.f32 %v751, %v1199
    %1201 = vmatprep.mubr.f32.mxu0 0.0
    %1202 = vmatmul.mubr.f32.gmra.mxu0 %v216
    %v1203 = vpop.f32.mrf.mxu0
    %v1204 = vadd.f32 %v755, %v1203
    %v1205 = vpop.f32.mrf.mxu0
    %v1206 = vadd.f32 %v757, %v1205
    %1207 = vmatprep.mubr.f32.mxu0 0.0
    %1208 = vmatmul.mubr.f32.gmra.mxu0 %v219
    %v1209 = vpop.f32.mrf.mxu0
    %v1210 = vadd.f32 %v761, %v1209
    %v1211 = vpop.f32.mrf.mxu0
    %v1212 = vadd.f32 %v763, %v1211
    %1213 = vdwg.mxu0
    %vm1214 = vcmask 523264
    %1215 = vst.msk [vmem:[%s2] sm:$0xff] %vm1214, %v832
    %1216 = vst.msk [vmem:[%s2 + $0x8] sm:$0xff] %vm1214, %v838
    %1217 = vst.msk [vmem:[%s2 + $0x10] sm:$0xff] %vm1214, %v844
    %1218 = vst.msk [vmem:[%s2 + $0x18] sm:$0xff] %vm1214, %v850
    %1219 = vst.msk [vmem:[%s2 + $0x20] sm:$0xff] %vm1214, %v856
    %1220 = vst.msk [vmem:[%s2 + $0x28] sm:$0xff] %vm1214, %v862
    %1221 = vst.msk [vmem:[%s2 + $0x30] sm:$0xff] %vm1214, %v868
    %1222 = vst.msk [vmem:[%s2 + $0x38] sm:$0xff] %vm1214, %v874
    %1223 = vst.msk [vmem:[%s2 + $0x40] sm:$0xff] %vm1214, %v880
    %1224 = vst.msk [vmem:[%s2 + $0x48] sm:$0xff] %vm1214, %v886
    %1225 = vst.msk [vmem:[%s2 + $0x50] sm:$0xff] %vm1214, %v892
    %1226 = vst.msk [vmem:[%s2 + $0x58] sm:$0xff] %vm1214, %v898
    %1227 = vst.msk [vmem:[%s2 + $0x60] sm:$0xff] %vm1214, %v904
    %1228 = vst.msk [vmem:[%s2 + $0x68] sm:$0xff] %vm1214, %v910
    %1229 = vst.msk [vmem:[%s2 + $0x70] sm:$0xff] %vm1214, %v916
    %1230 = vst.msk [vmem:[%s2 + $0x78] sm:$0xff] %vm1214, %v922
    %1231 = vst.msk [vmem:[%s2 + $0x80] sm:$0xff] %vm1214, %v928
    %1232 = vst.msk [vmem:[%s2 + $0x88] sm:$0xff] %vm1214, %v934
    %1233 = vst.msk [vmem:[%s2 + $0x90] sm:$0xff] %vm1214, %v940
    %1234 = vst.msk [vmem:[%s2 + $0x98] sm:$0xff] %vm1214, %v946
    %1235 = vst.msk [vmem:[%s2 + $0xa0] sm:$0xff] %vm1214, %v952
    %1236 = vst.msk [vmem:[%s2 + $0xa8] sm:$0xff] %vm1214, %v958
    %1237 = vst.msk [vmem:[%s2 + $0xb0] sm:$0xff] %vm1214, %v964
    %1238 = vst.msk [vmem:[%s2 + $0xb8] sm:$0xff] %vm1214, %v970
    %1239 = vst.msk [vmem:[%s2 + $0xc0] sm:$0xff] %vm1214, %v976
    %1240 = vst.msk [vmem:[%s2 + $0xc8] sm:$0xff] %vm1214, %v982
    %1241 = vst.msk [vmem:[%s2 + $0xd0] sm:$0xff] %vm1214, %v988
    %1242 = vst.msk [vmem:[%s2 + $0xd8] sm:$0xff] %vm1214, %v994
    %1243 = vst.msk [vmem:[%s2 + $0xe0] sm:$0xff] %vm1214, %v1000
    %1244 = vst.msk [vmem:[%s2 + $0xe8] sm:$0xff] %vm1214, %v1006
    %1245 = vst.msk [vmem:[%s2 + $0xf0] sm:$0xff] %vm1214, %v1012
    %1246 = vst.msk [vmem:[%s2 + $0xf8] sm:$0xff] %vm1214, %v1018
    %1247 = vst.msk [vmem:[%s2 + $0x100] sm:$0xff] %vm1214, %v1024
    %1248 = vst.msk [vmem:[%s2 + $0x108] sm:$0xff] %vm1214, %v1030
    %1249 = vst.msk [vmem:[%s2 + $0x110] sm:$0xff] %vm1214, %v1036
    %1250 = vst.msk [vmem:[%s2 + $0x118] sm:$0xff] %vm1214, %v1042
    %1251 = vst.msk [vmem:[%s2 + $0x120] sm:$0xff] %vm1214, %v1048
    %1252 = vst.msk [vmem:[%s2 + $0x128] sm:$0xff] %vm1214, %v1054
    %1253 = vst.msk [vmem:[%s2 + $0x130] sm:$0xff] %vm1214, %v1060
    %1254 = vst.msk [vmem:[%s2 + $0x138] sm:$0xff] %vm1214, %v1066
    %1255 = vst.msk [vmem:[%s2 + $0x140] sm:$0xff] %vm1214, %v1072
    %1256 = vst.msk [vmem:[%s2 + $0x148] sm:$0xff] %vm1214, %v1078
    %1257 = vst.msk [vmem:[%s2 + $0x150] sm:$0xff] %vm1214, %v1084
    %1258 = vst.msk [vmem:[%s2 + $0x158] sm:$0xff] %vm1214, %v1090
    %1259 = vst.msk [vmem:[%s2 + $0x160] sm:$0xff] %vm1214, %v1096
    %1260 = vst.msk [vmem:[%s2 + $0x168] sm:$0xff] %vm1214, %v1102
    %1261 = vst.msk [vmem:[%s2 + $0x170] sm:$0xff] %vm1214, %v1108
    %1262 = vst.msk [vmem:[%s2 + $0x178] sm:$0xff] %vm1214, %v1114
    %1263 = vst.msk [vmem:[%s2 + $0x180] sm:$0xff] %vm1214, %v1120
    %1264 = vst.msk [vmem:[%s2 + $0x188] sm:$0xff] %vm1214, %v1126
    %1265 = vst.msk [vmem:[%s2 + $0x190] sm:$0xff] %vm1214, %v1132
    %1266 = vst.msk [vmem:[%s2 + $0x198] sm:$0xff] %vm1214, %v1138
    %1267 = vst.msk [vmem:[%s2 + $0x1a0] sm:$0xff] %vm1214, %v1144
    %1268 = vst.msk [vmem:[%s2 + $0x1a8] sm:$0xff] %vm1214, %v1150
    %1269 = vst.msk [vmem:[%s2 + $0x1b0] sm:$0xff] %vm1214, %v1156
    %1270 = vst.msk [vmem:[%s2 + $0x1b8] sm:$0xff] %vm1214, %v1162
    %1271 = vst.msk [vmem:[%s2 + $0x1c0] sm:$0xff] %vm1214, %v1168
    %1272 = vst.msk [vmem:[%s2 + $0x1c8] sm:$0xff] %vm1214, %v1174
    %1273 = vst.msk [vmem:[%s2 + $0x1d0] sm:$0xff] %vm1214, %v1180
    %1274 = vst.msk [vmem:[%s2 + $0x1d8] sm:$0xff] %vm1214, %v1186
    %1275 = vst.msk [vmem:[%s2 + $0x1e0] sm:$0xff] %vm1214, %v1192
    %1276 = vst.msk [vmem:[%s2 + $0x1e8] sm:$0xff] %vm1214, %v1198
    %1277 = vst.msk [vmem:[%s2 + $0x1f0] sm:$0xff] %vm1214, %v1204
    %1278 = vst.msk [vmem:[%s2 + $0x1f8] sm:$0xff] %vm1214, %v1210
    %1343 = vrot.lane.b32.xlu0 %v832, 64
    %v1344 = vpop.permute.xlu0 %1343
    %1345 = vrot.lane.b32.xlu0 %v838, 64
    %v1346 = vpop.permute.xlu0 %1345
    %1347 = vrot.lane.b32.xlu0 %v844, 64
    %v1348 = vpop.permute.xlu0 %1347
    %1349 = vrot.lane.b32.xlu0 %v850, 64
    %v1350 = vpop.permute.xlu0 %1349
    %1351 = vrot.lane.b32.xlu0 %v856, 64
    %v1352 = vpop.permute.xlu0 %1351
    %1353 = vrot.lane.b32.xlu0 %v862, 64
    %v1354 = vpop.permute.xlu0 %1353
    %1355 = vrot.lane.b32.xlu0 %v868, 64
    %v1356 = vpop.permute.xlu0 %1355
    %1357 = vrot.lane.b32.xlu0 %v874, 64
    %v1358 = vpop.permute.xlu0 %1357
    %1359 = vrot.lane.b32.xlu0 %v880, 64
    %v1360 = vpop.permute.xlu0 %1359
    %1361 = vrot.lane.b32.xlu0 %v886, 64
    %v1362 = vpop.permute.xlu0 %1361
    %1363 = vrot.lane.b32.xlu0 %v892, 64
    %v1364 = vpop.permute.xlu0 %1363
    %1365 = vrot.lane.b32.xlu0 %v898, 64
    %v1366 = vpop.permute.xlu0 %1365
    %1367 = vrot.lane.b32.xlu0 %v904, 64
    %v1368 = vpop.permute.xlu0 %1367
    %1369 = vrot.lane.b32.xlu0 %v910, 64
    %v1370 = vpop.permute.xlu0 %1369
    %1371 = vrot.lane.b32.xlu0 %v916, 64
    %v1372 = vpop.permute.xlu0 %1371
    %1373 = vrot.lane.b32.xlu0 %v922, 64
    %v1374 = vpop.permute.xlu0 %1373
    %1375 = vrot.lane.b32.xlu0 %v928, 64
    %v1376 = vpop.permute.xlu0 %1375
    %1377 = vrot.lane.b32.xlu0 %v934, 64
    %v1378 = vpop.permute.xlu0 %1377
    %1379 = vrot.lane.b32.xlu0 %v940, 64
    %v1380 = vpop.permute.xlu0 %1379
    %1381 = vrot.lane.b32.xlu0 %v946, 64
    %v1382 = vpop.permute.xlu0 %1381
    %1383 = vrot.lane.b32.xlu0 %v952, 64
    %v1384 = vpop.permute.xlu0 %1383
    %1385 = vrot.lane.b32.xlu0 %v958, 64
    %v1386 = vpop.permute.xlu0 %1385
    %1387 = vrot.lane.b32.xlu0 %v964, 64
    %v1388 = vpop.permute.xlu0 %1387
    %1389 = vrot.lane.b32.xlu0 %v970, 64
    %v1390 = vpop.permute.xlu0 %1389
    %1391 = vrot.lane.b32.xlu0 %v976, 64
    %v1392 = vpop.permute.xlu0 %1391
    %1393 = vrot.lane.b32.xlu0 %v982, 64
    %v1394 = vpop.permute.xlu0 %1393
    %1395 = vrot.lane.b32.xlu0 %v988, 64
    %v1396 = vpop.permute.xlu0 %1395
    %1397 = vrot.lane.b32.xlu0 %v994, 64
    %v1398 = vpop.permute.xlu0 %1397
    %1399 = vrot.lane.b32.xlu0 %v1000, 64
    %v1400 = vpop.permute.xlu0 %1399
    %1401 = vrot.lane.b32.xlu0 %v1006, 64
    %v1402 = vpop.permute.xlu0 %1401
    %1403 = vrot.lane.b32.xlu0 %v1012, 64
    %v1404 = vpop.permute.xlu0 %1403
    %1405 = vrot.lane.b32.xlu0 %v1018, 64
    %v1406 = vpop.permute.xlu0 %1405
    %1407 = vrot.lane.b32.xlu0 %v1024, 64
    %v1408 = vpop.permute.xlu0 %1407
    %1409 = vrot.lane.b32.xlu0 %v1030, 64
    %v1410 = vpop.permute.xlu0 %1409
    %1411 = vrot.lane.b32.xlu0 %v1036, 64
    %v1412 = vpop.permute.xlu0 %1411
    %1413 = vrot.lane.b32.xlu0 %v1042, 64
    %v1414 = vpop.permute.xlu0 %1413
    %1415 = vrot.lane.b32.xlu0 %v1048, 64
    %v1416 = vpop.permute.xlu0 %1415
    %1417 = vrot.lane.b32.xlu0 %v1054, 64
    %v1418 = vpop.permute.xlu0 %1417
    %1419 = vrot.lane.b32.xlu0 %v1060, 64
    %v1420 = vpop.permute.xlu0 %1419
    %1421 = vrot.lane.b32.xlu0 %v1066, 64
    %v1422 = vpop.permute.xlu0 %1421
    %1423 = vrot.lane.b32.xlu0 %v1072, 64
    %v1424 = vpop.permute.xlu0 %1423
    %1425 = vrot.lane.b32.xlu0 %v1078, 64
    %v1426 = vpop.permute.xlu0 %1425
    %1427 = vrot.lane.b32.xlu0 %v1084, 64
    %v1428 = vpop.permute.xlu0 %1427
    %1429 = vrot.lane.b32.xlu0 %v1090, 64
    %v1430 = vpop.permute.xlu0 %1429
    %1431 = vrot.lane.b32.xlu0 %v1096, 64
    %v1432 = vpop.permute.xlu0 %1431
    %1433 = vrot.lane.b32.xlu0 %v1102, 64
    %v1434 = vpop.permute.xlu0 %1433
    %1435 = vrot.lane.b32.xlu0 %v1108, 64
    %v1436 = vpop.permute.xlu0 %1435
    %1437 = vrot.lane.b32.xlu0 %v1114, 64
    %v1438 = vpop.permute.xlu0 %1437
    %1439 = vrot.lane.b32.xlu0 %v1120, 64
    %v1440 = vpop.permute.xlu0 %1439
    %1441 = vrot.lane.b32.xlu0 %v1126, 64
    %v1442 = vpop.permute.xlu0 %1441
    %1443 = vrot.lane.b32.xlu0 %v1132, 64
    %v1444 = vpop.permute.xlu0 %1443
    %1445 = vrot.lane.b32.xlu0 %v1138, 64
    %v1446 = vpop.permute.xlu0 %1445
    %1447 = vrot.lane.b32.xlu0 %v1144, 64
    %v1448 = vpop.permute.xlu0 %1447
    %1449 = vrot.lane.b32.xlu0 %v1150, 64
    %v1450 = vpop.permute.xlu0 %1449
    %1451 = vrot.lane.b32.xlu0 %v1156, 64
    %v1452 = vpop.permute.xlu0 %1451
    %1453 = vrot.lane.b32.xlu0 %v1162, 64
    %v1454 = vpop.permute.xlu0 %1453
    %1455 = vrot.lane.b32.xlu0 %v1168, 64
    %v1456 = vpop.permute.xlu0 %1455
    %1457 = vrot.lane.b32.xlu0 %v1174, 64
    %v1458 = vpop.permute.xlu0 %1457
    %1459 = vrot.lane.b32.xlu0 %v1180, 64
    %v1460 = vpop.permute.xlu0 %1459
    %1461 = vrot.lane.b32.xlu0 %v1186, 64
    %v1462 = vpop.permute.xlu0 %1461
    %1463 = vrot.lane.b32.xlu0 %v1192, 64
    %v1464 = vpop.permute.xlu0 %1463
    %1465 = vrot.lane.b32.xlu0 %v1198, 64
    %v1466 = vpop.permute.xlu0 %1465
    %1467 = vrot.lane.b32.xlu0 %v1204, 64
    %v1468 = vpop.permute.xlu0 %1467
    %1469 = vrot.lane.b32.xlu0 %v1210, 64
    %v1470 = vpop.permute.xlu0 %1469
    %1535 = vst.msk [vmem:[%s3] sm:$0xff] %vm1214, %v1344
    %1536 = vst.msk [vmem:[%s3 + $0x8] sm:$0xff] %vm1214, %v1346
    %1537 = vst.msk [vmem:[%s3 + $0x10] sm:$0xff] %vm1214, %v1348
    %1538 = vst.msk [vmem:[%s3 + $0x18] sm:$0xff] %vm1214, %v1350
    %1539 = vst.msk [vmem:[%s3 + $0x20] sm:$0xff] %vm1214, %v1352
    %1540 = vst.msk [vmem:[%s3 + $0x28] sm:$0xff] %vm1214, %v1354
    %1541 = vst.msk [vmem:[%s3 + $0x30] sm:$0xff] %vm1214, %v1356
    %1542 = vst.msk [vmem:[%s3 + $0x38] sm:$0xff] %vm1214, %v1358
    %1543 = vst.msk [vmem:[%s3 + $0x40] sm:$0xff] %vm1214, %v1360
    %1544 = vst.msk [vmem:[%s3 + $0x48] sm:$0xff] %vm1214, %v1362
    %1545 = vst.msk [vmem:[%s3 + $0x50] sm:$0xff] %vm1214, %v1364
    %1546 = vst.msk [vmem:[%s3 + $0x58] sm:$0xff] %vm1214, %v1366
    %1547 = vst.msk [vmem:[%s3 + $0x60] sm:$0xff] %vm1214, %v1368
    %1548 = vst.msk [vmem:[%s3 + $0x68] sm:$0xff] %vm1214, %v1370
    %1549 = vst.msk [vmem:[%s3 + $0x70] sm:$0xff] %vm1214, %v1372
    %1550 = vst.msk [vmem:[%s3 + $0x78] sm:$0xff] %vm1214, %v1374
    %1551 = vst.msk [vmem:[%s3 + $0x80] sm:$0xff] %vm1214, %v1376
    %1552 = vst.msk [vmem:[%s3 + $0x88] sm:$0xff] %vm1214, %v1378
    %1553 = vst.msk [vmem:[%s3 + $0x90] sm:$0xff] %vm1214, %v1380
    %1554 = vst.msk [vmem:[%s3 + $0x98] sm:$0xff] %vm1214, %v1382
    %1555 = vst.msk [vmem:[%s3 + $0xa0] sm:$0xff] %vm1214, %v1384
    %1556 = vst.msk [vmem:[%s3 + $0xa8] sm:$0xff] %vm1214, %v1386
    %1557 = vst.msk [vmem:[%s3 + $0xb0] sm:$0xff] %vm1214, %v1388
    %1558 = vst.msk [vmem:[%s3 + $0xb8] sm:$0xff] %vm1214, %v1390
    %1559 = vst.msk [vmem:[%s3 + $0xc0] sm:$0xff] %vm1214, %v1392
    %1560 = vst.msk [vmem:[%s3 + $0xc8] sm:$0xff] %vm1214, %v1394
    %1561 = vst.msk [vmem:[%s3 + $0xd0] sm:$0xff] %vm1214, %v1396
    %1562 = vst.msk [vmem:[%s3 + $0xd8] sm:$0xff] %vm1214, %v1398
    %1563 = vst.msk [vmem:[%s3 + $0xe0] sm:$0xff] %vm1214, %v1400
    %1564 = vst.msk [vmem:[%s3 + $0xe8] sm:$0xff] %vm1214, %v1402
    %1565 = vst.msk [vmem:[%s3 + $0xf0] sm:$0xff] %vm1214, %v1404
    %1566 = vst.msk [vmem:[%s3 + $0xf8] sm:$0xff] %vm1214, %v1406
    %1567 = vst.msk [vmem:[%s3 + $0x100] sm:$0xff] %vm1214, %v1408
    %1568 = vst.msk [vmem:[%s3 + $0x108] sm:$0xff] %vm1214, %v1410
    %1569 = vst.msk [vmem:[%s3 + $0x110] sm:$0xff] %vm1214, %v1412
    %1570 = vst.msk [vmem:[%s3 + $0x118] sm:$0xff] %vm1214, %v1414
    %1571 = vst.msk [vmem:[%s3 + $0x120] sm:$0xff] %vm1214, %v1416
    %1572 = vst.msk [vmem:[%s3 + $0x128] sm:$0xff] %vm1214, %v1418
    %1573 = vst.msk [vmem:[%s3 + $0x130] sm:$0xff] %vm1214, %v1420
    %1574 = vst.msk [vmem:[%s3 + $0x138] sm:$0xff] %vm1214, %v1422
    %1575 = vst.msk [vmem:[%s3 + $0x140] sm:$0xff] %vm1214, %v1424
    %1576 = vst.msk [vmem:[%s3 + $0x148] sm:$0xff] %vm1214, %v1426
    %1577 = vst.msk [vmem:[%s3 + $0x150] sm:$0xff] %vm1214, %v1428
    %1578 = vst.msk [vmem:[%s3 + $0x158] sm:$0xff] %vm1214, %v1430
    %1579 = vst.msk [vmem:[%s3 + $0x160] sm:$0xff] %vm1214, %v1432
    %1580 = vst.msk [vmem:[%s3 + $0x168] sm:$0xff] %vm1214, %v1434
    %1581 = vst.msk [vmem:[%s3 + $0x170] sm:$0xff] %vm1214, %v1436
    %1582 = vst.msk [vmem:[%s3 + $0x178] sm:$0xff] %vm1214, %v1438
    %1583 = vst.msk [vmem:[%s3 + $0x180] sm:$0xff] %vm1214, %v1440
    %1584 = vst.msk [vmem:[%s3 + $0x188] sm:$0xff] %vm1214, %v1442
    %1585 = vst.msk [vmem:[%s3 + $0x190] sm:$0xff] %vm1214, %v1444
    %1586 = vst.msk [vmem:[%s3 + $0x198] sm:$0xff] %vm1214, %v1446
    %1587 = vst.msk [vmem:[%s3 + $0x1a0] sm:$0xff] %vm1214, %v1448
    %1588 = vst.msk [vmem:[%s3 + $0x1a8] sm:$0xff] %vm1214, %v1450
    %1589 = vst.msk [vmem:[%s3 + $0x1b0] sm:$0xff] %vm1214, %v1452
    %1590 = vst.msk [vmem:[%s3 + $0x1b8] sm:$0xff] %vm1214, %v1454
    %1591 = vst.msk [vmem:[%s3 + $0x1c0] sm:$0xff] %vm1214, %v1456
    %1592 = vst.msk [vmem:[%s3 + $0x1c8] sm:$0xff] %vm1214, %v1458
    %1593 = vst.msk [vmem:[%s3 + $0x1d0] sm:$0xff] %vm1214, %v1460
    %1594 = vst.msk [vmem:[%s3 + $0x1d8] sm:$0xff] %vm1214, %v1462
    %1595 = vst.msk [vmem:[%s3 + $0x1e0] sm:$0xff] %vm1214, %v1464
    %1596 = vst.msk [vmem:[%s3 + $0x1e8] sm:$0xff] %vm1214, %v1466
    %1597 = vst.msk [vmem:[%s3 + $0x1f0] sm:$0xff] %vm1214, %v1468
    %1598 = vst.msk [vmem:[%s3 + $0x1f8] sm:$0xff] %vm1214, %v1470
    %1599 = vst.msk [vmem:[%s4] sm:$0xff] %vm1214, %v834
    %1600 = vst.msk [vmem:[%s4 + $0x8] sm:$0xff] %vm1214, %v840
    %1601 = vst.msk [vmem:[%s4 + $0x10] sm:$0xff] %vm1214, %v846
    %1602 = vst.msk [vmem:[%s4 + $0x18] sm:$0xff] %vm1214, %v852
    %1603 = vst.msk [vmem:[%s4 + $0x20] sm:$0xff] %vm1214, %v858
    %1604 = vst.msk [vmem:[%s4 + $0x28] sm:$0xff] %vm1214, %v864
    %1605 = vst.msk [vmem:[%s4 + $0x30] sm:$0xff] %vm1214, %v870
    %1606 = vst.msk [vmem:[%s4 + $0x38] sm:$0xff] %vm1214, %v876
    %1607 = vst.msk [vmem:[%s4 + $0x40] sm:$0xff] %vm1214, %v882
    %1608 = vst.msk [vmem:[%s4 + $0x48] sm:$0xff] %vm1214, %v888
    %1609 = vst.msk [vmem:[%s4 + $0x50] sm:$0xff] %vm1214, %v894
    %1610 = vst.msk [vmem:[%s4 + $0x58] sm:$0xff] %vm1214, %v900
    %1611 = vst.msk [vmem:[%s4 + $0x60] sm:$0xff] %vm1214, %v906
    %1612 = vst.msk [vmem:[%s4 + $0x68] sm:$0xff] %vm1214, %v912
    %1613 = vst.msk [vmem:[%s4 + $0x70] sm:$0xff] %vm1214, %v918
    %1614 = vst.msk [vmem:[%s4 + $0x78] sm:$0xff] %vm1214, %v924
    %1615 = vst.msk [vmem:[%s4 + $0x80] sm:$0xff] %vm1214, %v930
    %1616 = vst.msk [vmem:[%s4 + $0x88] sm:$0xff] %vm1214, %v936
    %1617 = vst.msk [vmem:[%s4 + $0x90] sm:$0xff] %vm1214, %v942
    %1618 = vst.msk [vmem:[%s4 + $0x98] sm:$0xff] %vm1214, %v948
    %1619 = vst.msk [vmem:[%s4 + $0xa0] sm:$0xff] %vm1214, %v954
    %1620 = vst.msk [vmem:[%s4 + $0xa8] sm:$0xff] %vm1214, %v960
    %1621 = vst.msk [vmem:[%s4 + $0xb0] sm:$0xff] %vm1214, %v966
    %1622 = vst.msk [vmem:[%s4 + $0xb8] sm:$0xff] %vm1214, %v972
    %1623 = vst.msk [vmem:[%s4 + $0xc0] sm:$0xff] %vm1214, %v978
    %1624 = vst.msk [vmem:[%s4 + $0xc8] sm:$0xff] %vm1214, %v984
    %1625 = vst.msk [vmem:[%s4 + $0xd0] sm:$0xff] %vm1214, %v990
    %1626 = vst.msk [vmem:[%s4 + $0xd8] sm:$0xff] %vm1214, %v996
    %1627 = vst.msk [vmem:[%s4 + $0xe0] sm:$0xff] %vm1214, %v1002
    %1628 = vst.msk [vmem:[%s4 + $0xe8] sm:$0xff] %vm1214, %v1008
    %1629 = vst.msk [vmem:[%s4 + $0xf0] sm:$0xff] %vm1214, %v1014
    %1630 = vst.msk [vmem:[%s4 + $0xf8] sm:$0xff] %vm1214, %v1020
    %1631 = vst.msk [vmem:[%s4 + $0x100] sm:$0xff] %vm1214, %v1026
    %1632 = vst.msk [vmem:[%s4 + $0x108] sm:$0xff] %vm1214, %v1032
    %1633 = vst.msk [vmem:[%s4 + $0x110] sm:$0xff] %vm1214, %v1038
    %1634 = vst.msk [vmem:[%s4 + $0x118] sm:$0xff] %vm1214, %v1044
    %1635 = vst.msk [vmem:[%s4 + $0x120] sm:$0xff] %vm1214, %v1050
    %1636 = vst.msk [vmem:[%s4 + $0x128] sm:$0xff] %vm1214, %v1056
    %1637 = vst.msk [vmem:[%s4 + $0x130] sm:$0xff] %vm1214, %v1062
    %1638 = vst.msk [vmem:[%s4 + $0x138] sm:$0xff] %vm1214, %v1068
    %1639 = vst.msk [vmem:[%s4 + $0x140] sm:$0xff] %vm1214, %v1074
    %1640 = vst.msk [vmem:[%s4 + $0x148] sm:$0xff] %vm1214, %v1080
    %1641 = vst.msk [vmem:[%s4 + $0x150] sm:$0xff] %vm1214, %v1086
    %1642 = vst.msk [vmem:[%s4 + $0x158] sm:$0xff] %vm1214, %v1092
    %1643 = vst.msk [vmem:[%s4 + $0x160] sm:$0xff] %vm1214, %v1098
    %1644 = vst.msk [vmem:[%s4 + $0x168] sm:$0xff] %vm1214, %v1104
    %1645 = vst.msk [vmem:[%s4 + $0x170] sm:$0xff] %vm1214, %v1110
    %1646 = vst.msk [vmem:[%s4 + $0x178] sm:$0xff] %vm1214, %v1116
    %1647 = vst.msk [vmem:[%s4 + $0x180] sm:$0xff] %vm1214, %v1122
    %1648 = vst.msk [vmem:[%s4 + $0x188] sm:$0xff] %vm1214, %v1128
    %1649 = vst.msk [vmem:[%s4 + $0x190] sm:$0xff] %vm1214, %v1134
    %1650 = vst.msk [vmem:[%s4 + $0x198] sm:$0xff] %vm1214, %v1140
    %1651 = vst.msk [vmem:[%s4 + $0x1a0] sm:$0xff] %vm1214, %v1146
    %1652 = vst.msk [vmem:[%s4 + $0x1a8] sm:$0xff] %vm1214, %v1152
    %1653 = vst.msk [vmem:[%s4 + $0x1b0] sm:$0xff] %vm1214, %v1158
    %1654 = vst.msk [vmem:[%s4 + $0x1b8] sm:$0xff] %vm1214, %v1164
    %1655 = vst.msk [vmem:[%s4 + $0x1c0] sm:$0xff] %vm1214, %v1170
    %1656 = vst.msk [vmem:[%s4 + $0x1c8] sm:$0xff] %vm1214, %v1176
    %1657 = vst.msk [vmem:[%s4 + $0x1d0] sm:$0xff] %vm1214, %v1182
    %1658 = vst.msk [vmem:[%s4 + $0x1d8] sm:$0xff] %vm1214, %v1188
    %1659 = vst.msk [vmem:[%s4 + $0x1e0] sm:$0xff] %vm1214, %v1194
    %1660 = vst.msk [vmem:[%s4 + $0x1e8] sm:$0xff] %vm1214, %v1200
    %1661 = vst.msk [vmem:[%s4 + $0x1f0] sm:$0xff] %vm1214, %v1206
    %1662 = vst.msk [vmem:[%s4 + $0x1f8] sm:$0xff] %vm1214, %v1212
    // Predicated region
    $region14: #{tpu_custom_call.1} parent=1 // pred_check
      _
    $region15: #{tpu_custom_call.1} parent=1 // pred_check_branch
      %1664 = sbr.rel (0) target = $region17
    $region16: #{tpu_custom_call.1} parent=1 // pred_region
      _
    $region17: #{tpu_custom_call.1} parent=1 // pred_fallthru
      _
    // Predicated region
    $region18: #{tpu_custom_call.1} parent=1 // pred_check
      _
    $region19: #{tpu_custom_call.1} parent=1 // pred_check_branch
      %1666 = sbr.rel (0) target = $region21
    $region20: #{tpu_custom_call.1} parent=1 // pred_region
      _
    $region21: #{tpu_custom_call.1} parent=1 // pred_fallthru
      _
    // Predicated region
    $region22: #{tpu_custom_call.1} parent=1 // pred_check
      _
    $region23: #{tpu_custom_call.1} parent=1 // pred_check_branch
      %1668 = sbr.rel (0) target = $region25
    $region24: #{tpu_custom_call.1} parent=1 // pred_region
      _
    $region25: #{tpu_custom_call.1} parent=1 // pred_fallthru
      _
    // Predicated region
    $region26: #{tpu_custom_call.1} parent=1 // pred_check
      _
    $region27: #{tpu_custom_call.1} parent=1 // pred_check_branch
      %1670 = sbr.rel (0) target = $region29
    $region28: #{tpu_custom_call.1} parent=1 // pred_region
      _
    $region29: #{tpu_custom_call.1} parent=1 // pred_fallthru
      _
    // Predicated region
    $region30: #{tpu_custom_call.1} parent=1 // pred_check
      _
    $region31: #{tpu_custom_call.1} parent=1 // pred_check_branch
      %1672 = sbr.rel (0) target = $region33
    $region32: #{tpu_custom_call.1} parent=1 // pred_region
      _
    $region33: #{tpu_custom_call.1} parent=1 // pred_fallthru
      _
    // Predicated region
    $region34: #{tpu_custom_call.1} parent=1 // pred_check
      _
    $region35: #{tpu_custom_call.1} parent=1 // pred_check_branch
      %1674 = sbr.rel (0) target = $region37
    $region36: #{tpu_custom_call.1} parent=1 // pred_region
      _
    $region37: #{tpu_custom_call.1} parent=1 // pred_fallthru
      _
    %1675 = vsyncpa [#allocation3], 1

</llo_original>
